<compile_context>
chip_gen: v6e
topology: v6e:2x2x1
jax: 0.10.0
libtpu: 0.0.40
codegen_flags: <defaults>
</compile_context>

<pallas_src>
import functools

import jax
import jax.numpy as jnp
from jax import lax
from jax.experimental import pallas as pl
from jax.experimental.pallas import tpu as pltpu

BN_EPS = 1e-5  # nn.BatchNorm2d default


def _round_up(x, m):
    return (x + m - 1) // m * m


def _conv_taps(x_ref, w_ref, *, wp, mv):
    """3x3 conv for one image as 9 accumulating MXU dots over lane-shifted views.

    x_ref: (1, Cin, Lp) bf16 flattened padded image; w_ref: (9, Cout, Cin) bf16.
    Returns (Cout, mv) f32 where column m = h*wp + w (padded-width flattening).
    """
    cout = w_ref.shape[1]
    acc = jnp.zeros((cout, mv), jnp.float32)
    for kh in range(3):
        for kw in range(3):
            off = kh * wp + kw                                   # static lane offset
            xs = x_ref[0, :, off:off + mv]                       # (Cin, mv) bf16 "halo view"
            acc = acc + jnp.dot(w_ref[kh * 3 + kw], xs,
                                preferred_element_type=jnp.float32)
    return acc


def _conv_stats_kernel(x_ref, w_ref, mask_ref, s1_ref, s2_ref, *, wp, mv):
    # Pass 1: conv + per-image partial BatchNorm sums (garbage/pad columns masked out).
    y = _conv_taps(x_ref, w_ref, wp=wp, mv=mv)                   # (Cout, mv) f32
    ym = y * mask_ref[...]                                       # mask is 0/1, (1, mv)
    s1_ref[...] = jnp.sum(ym, axis=1, keepdims=True)[None]       # sum(y)   per channel
    s2_ref[...] = jnp.sum(ym * ym, axis=1, keepdims=True)[None]  # sum(y^2) per channel


def _conv_bn_relu_kernel(x_ref, w_ref, scale_ref, shift_ref, o_ref, *, wp, mv):
    # Pass 2: recompute the (bit-identical) conv, apply folded BN + ReLU, store lane-dense.
    y = _conv_taps(x_ref, w_ref, wp=wp, mv=mv)
    z = y * scale_ref[...] + shift_ref[...]
    o_ref[...] = jnp.maximum(z, 0.0)[None].astype(o_ref.dtype)


def conv_block(x_nchw, w_oihw, gamma, beta, *, kernel_size=3, stride=1):
    """ConvBlock forward (norm='BN' training-mode stats, act='ReLU').

    x_nchw: (N, Cin, H, W) f32; w_oihw: (Cout, Cin, 3, 3); gamma/beta: (Cout,).
    """
    assert kernel_size == 3 and stride == 1, "k=3, s=1 only (module defaults)"
    N, Cin, H, W = x_nchw.shape
    Cout = int(w_oihw.shape[0])
    pad = (kernel_size - 1) // 2                      # = 1
    Hp, Wp = H + 2 * pad, W + 2 * pad
    MV = H * Wp                                       # valid-row span of the flattened output
    MVp = _round_up(MV, 128)                          # lane-dense output width
    Lp = _round_up(MVp + 2 * Wp + 2, 128)             # flattened input length (covers max tap offset)

    # ---- input prep: bf16 FIRST, zero-pad spatially, flatten with padded width (no im2col) ----
    xb = x_nchw.astype(jnp.bfloat16)
    xp = jnp.pad(xb, ((0, 0), (0, 0), (pad, pad), (pad, pad)))      # (N, Cin, Hp, Wp)
    xf = jnp.pad(xp.reshape(N, Cin, Hp * Wp),
                 ((0, 0), (0, 0), (0, Lp - Hp * Wp)))               # (N, Cin, Lp) bf16

    # weights: (Cout, Cin, 3, 3) -> (9, Cout, Cin), tap index t = kh*3 + kw
    wt = jnp.transpose(w_oihw, (2, 3, 0, 1)).reshape(9, Cout, Cin).astype(jnp.bfloat16)

    # validity mask over flattened output positions: valid iff m < H*Wp and (m % Wp) < W
    m_idx = jnp.arange(MVp)
    mask = ((m_idx < MV) & (m_idx % Wp < W)).astype(jnp.float32).reshape(1, MVp)

    cparams = pltpu.CompilerParams(
        dimension_semantics=("parallel",),            # per-image steps; shards across v7x TCs
        vmem_limit_bytes=32 * 1024 * 1024,
    )

    # ---- pass 1: conv + per-image partial BN statistics ----
    s1, s2 = pl.pallas_call(
        functools.partial(_conv_stats_kernel, wp=Wp, mv=MVp),
        out_shape=(jax.ShapeDtypeStruct((N, Cout, 1), jnp.float32),
                   jax.ShapeDtypeStruct((N, Cout, 1), jnp.float32)),
        grid=(N,),
        in_specs=[
            pl.BlockSpec((1, Cin, Lp), lambda n: (n, 0, 0)),    # one padded image per step
            pl.BlockSpec((9, Cout, Cin), lambda n: (0, 0, 0)),  # resident weights
            pl.BlockSpec((1, MVp), lambda n: (0, 0)),           # resident validity mask
        ],
        out_specs=(pl.BlockSpec((1, Cout, 1), lambda n: (n, 0, 0)),
                   pl.BlockSpec((1, Cout, 1), lambda n: (n, 0, 0))),
        compiler_params=cparams,
    )(xf, wt, mask)

    # ---- tiny glue: exact global batch stats + folded scale/shift (all f32) ----
    cnt = jnp.asarray(N * H * W, jnp.float32)
    mean = jnp.sum(s1, axis=0) / cnt                   # (Cout, 1)
    ex2 = jnp.sum(s2, axis=0) / cnt
    var = jnp.maximum(ex2 - mean * mean, 0.0)          # biased variance, clamped
    scale = gamma.reshape(Cout, 1).astype(jnp.float32) * lax.rsqrt(var + BN_EPS)
    shift = beta.reshape(Cout, 1).astype(jnp.float32) - mean * scale

    # ---- pass 2: recompute conv + folded BN + ReLU, write batch-major lane-dense output ----
    out_flat = pl.pallas_call(
        functools.partial(_conv_bn_relu_kernel, wp=Wp, mv=MVp),
        out_shape=jax.ShapeDtypeStruct((N, Cout, MVp), jnp.float32),
        grid=(N,),
        in_specs=[
            pl.BlockSpec((1, Cin, Lp), lambda n: (n, 0, 0)),
            pl.BlockSpec((9, Cout, Cin), lambda n: (0, 0, 0)),
            pl.BlockSpec((Cout, 1), lambda n: (0, 0)),          # resident folded scale
            pl.BlockSpec((Cout, 1), lambda n: (0, 0)),          # resident folded shift
        ],
        out_specs=pl.BlockSpec((1, Cout, MVp), lambda n: (n, 0, 0)),
        compiler_params=cparams,
    )(xf, wt, scale, shift)

    # NCHW assembly: drop the 128-rounding tail and the 2 padded-width columns (no transpose).
    out = out_flat[:, :, :MV].reshape(N, Cout, H, Wp)[:, :, :, :W]
    return out


def _reference(x, w, gamma, beta):
    """Pure-JAX reference: f32 conv -> training-mode BN -> ReLU."""
    y = lax.conv_general_dilated(
        x, w, window_strides=(1, 1), padding=((1, 1), (1, 1)),
        dimension_numbers=("NCHW", "OIHW", "NCHW"),
        precision=lax.Precision.HIGHEST)
    mean = jnp.mean(y, axis=(0, 2, 3), keepdims=True)
    var = jnp.var(y, axis=(0, 2, 3), keepdims=True)    # biased
    y_hat = (y - mean) * lax.rsqrt(var + BN_EPS)
    z = gamma.reshape(1, -1, 1, 1) * y_hat + beta.reshape(1, -1, 1, 1)
    return jnp.maximum(z, 0.0)


if __name__ == "__main__":
    # Small deterministic example consistent with ConvBlock(in_channels=4, out_channels=8)
    N, Cin, Cout, H, W = 2, 4, 8, 16, 16
    KH = KW = 3

    key = jax.random.PRNGKey(0)
    kx, kw, kg, kb = jax.random.split(key, 4)

    x = jax.random.normal(kx, (N, Cin, H, W), dtype=jnp.float32)
    fan_in = Cin * KH * KW
    w = jax.random.normal(kw, (Cout, Cin, KH, KW), dtype=jnp.float32) * (1.0 / fan_in) ** 0.5
    gamma = 1.0 + 0.1 * jax.random.normal(kg, (Cout,), dtype=jnp.float32)
    beta = 0.1 * jax.random.normal(kb, (Cout,), dtype=jnp.float32)

    fwd = jax.jit(conv_block)
    out = jax.block_until_ready(fwd(x, w, gamma, beta))
    assert out.shape == (N, Cout, H, W)

    ref = _reference(x, w, gamma, beta)
    err = float(jnp.max(jnp.abs(out - ref)))
    assert err < 8e-2, f"max abs err {err}"   # bf16 MXU operands vs f32 reference
    print("KERNEL_OK")
</pallas_src>

<mosaic_0001>
module attributes {stable_mosaic.version = 11 : i64} {
  func.func @_conv_stats_kernel(%arg0: i32, %arg1: memref<1x4x512xbf16, #tpu.memory_space<vmem>>, %arg2: memref<9x8x4xbf16, #tpu.memory_space<vmem>>, %arg3: memref<1x384xf32, #tpu.memory_space<vmem>>, %arg4: memref<1x8x1xf32, #tpu.memory_space<vmem>>, %arg5: memref<1x8x1xf32, #tpu.memory_space<vmem>>) attributes {dimension_semantics = [#tpu.dimension_semantics<parallel>], iteration_bounds = array<i64: 2>, scalar_prefetch = 0 : i64, scratch_operands = 0 : i64, tpu.core_type = #tpu.core_type<tc>, window_params = [{transform_indices = @transform_0, window_bounds = array<i64: 1, 4, 512>}, {pipeline_mode = #tpu.pipeline_mode<synchronous>, transform_indices = @transform_1, window_bounds = array<i64: 9, 8, 4>}, {pipeline_mode = #tpu.pipeline_mode<synchronous>, transform_indices = @transform_2, window_bounds = array<i64: 1, 384>}, {transform_indices = @transform_3, window_bounds = array<i64: 1, 8, 1>}, {transform_indices = @transform_4, window_bounds = array<i64: 1, 8, 1>}]} {
    %cst = arith.constant 0.000000e+00 : f32
    %0 = vector.broadcast %cst : f32 to vector<8x384xf32>
    %c0 = arith.constant 0 : index
    %c0_0 = arith.constant 0 : index
    %c0_1 = arith.constant 0 : index
    %1 = vector.load %arg1[%c0, %c0_0, %c0_1] : memref<1x4x512xbf16, #tpu.memory_space<vmem>>, vector<1x4x384xbf16>
    %2 = vector.shape_cast %1 : vector<1x4x384xbf16> to vector<4x384xbf16>
    %c0_2 = arith.constant 0 : index
    %c0_3 = arith.constant 0 : index
    %c0_4 = arith.constant 0 : index
    %3 = vector.load %arg2[%c0_2, %c0_3, %c0_4] : memref<9x8x4xbf16, #tpu.memory_space<vmem>>, vector<1x8x4xbf16>
    %4 = vector.shape_cast %3 : vector<1x8x4xbf16> to vector<8x4xbf16>
    %cst_5 = arith.constant dense<0.000000e+00> : vector<8x384xf32>
    %5 = tpu.matmul %4, %2, %cst_5 {dimension_numbers = #tpu.dot_dimension_numbers<[1], [0], [0], [1], [0, 0, 1, 1], [], []>} : vector<8x4xbf16>, vector<4x384xbf16>, vector<8x384xf32> -> vector<8x384xf32>
    %6 = arith.addf %0, %5 : vector<8x384xf32>
    %c0_6 = arith.constant 0 : index
    %c0_7 = arith.constant 0 : index
    %c1 = arith.constant 1 : index
    %7 = vector.load %arg1[%c0_6, %c0_7, %c1] : memref<1x4x512xbf16, #tpu.memory_space<vmem>>, vector<1x4x384xbf16>
    %8 = vector.shape_cast %7 : vector<1x4x384xbf16> to vector<4x384xbf16>
    %c1_8 = arith.constant 1 : index
    %c0_9 = arith.constant 0 : index
    %c0_10 = arith.constant 0 : index
    %9 = vector.load %arg2[%c1_8, %c0_9, %c0_10] : memref<9x8x4xbf16, #tpu.memory_space<vmem>>, vector<1x8x4xbf16>
    %10 = vector.shape_cast %9 : vector<1x8x4xbf16> to vector<8x4xbf16>
    %cst_11 = arith.constant dense<0.000000e+00> : vector<8x384xf32>
    %11 = tpu.matmul %10, %8, %cst_11 {dimension_numbers = #tpu.dot_dimension_numbers<[1], [0], [0], [1], [0, 0, 1, 1], [], []>} : vector<8x4xbf16>, vector<4x384xbf16>, vector<8x384xf32> -> vector<8x384xf32>
    %12 = arith.addf %6, %11 : vector<8x384xf32>
    %c0_12 = arith.constant 0 : index
    %c0_13 = arith.constant 0 : index
    %c2 = arith.constant 2 : index
    %13 = vector.load %arg1[%c0_12, %c0_13, %c2] : memref<1x4x512xbf16, #tpu.memory_space<vmem>>, vector<1x4x384xbf16>
    %14 = vector.shape_cast %13 : vector<1x4x384xbf16> to vector<4x384xbf16>
    %c2_14 = arith.constant 2 : index
    %c0_15 = arith.constant 0 : index
    %c0_16 = arith.constant 0 : index
    %15 = vector.load %arg2[%c2_14, %c0_15, %c0_16] : memref<9x8x4xbf16, #tpu.memory_space<vmem>>, vector<1x8x4xbf16>
    %16 = vector.shape_cast %15 : vector<1x8x4xbf16> to vector<8x4xbf16>
    %cst_17 = arith.constant dense<0.000000e+00> : vector<8x384xf32>
    %17 = tpu.matmul %16, %14, %cst_17 {dimension_numbers = #tpu.dot_dimension_numbers<[1], [0], [0], [1], [0, 0, 1, 1], [], []>} : vector<8x4xbf16>, vector<4x384xbf16>, vector<8x384xf32> -> vector<8x384xf32>
    %18 = arith.addf %12, %17 : vector<8x384xf32>
    %c0_18 = arith.constant 0 : index
    %c0_19 = arith.constant 0 : index
    %c18 = arith.constant 18 : index
    %19 = vector.load %arg1[%c0_18, %c0_19, %c18] : memref<1x4x512xbf16, #tpu.memory_space<vmem>>, vector<1x4x384xbf16>
    %20 = vector.shape_cast %19 : vector<1x4x384xbf16> to vector<4x384xbf16>
    %c3 = arith.constant 3 : index
    %c0_20 = arith.constant 0 : index
    %c0_21 = arith.constant 0 : index
    %21 = vector.load %arg2[%c3, %c0_20, %c0_21] : memref<9x8x4xbf16, #tpu.memory_space<vmem>>, vector<1x8x4xbf16>
    %22 = vector.shape_cast %21 : vector<1x8x4xbf16> to vector<8x4xbf16>
    %cst_22 = arith.constant dense<0.000000e+00> : vector<8x384xf32>
    %23 = tpu.matmul %22, %20, %cst_22 {dimension_numbers = #tpu.dot_dimension_numbers<[1], [0], [0], [1], [0, 0, 1, 1], [], []>} : vector<8x4xbf16>, vector<4x384xbf16>, vector<8x384xf32> -> vector<8x384xf32>
    %24 = arith.addf %18, %23 : vector<8x384xf32>
    %c0_23 = arith.constant 0 : index
    %c0_24 = arith.constant 0 : index
    %c19 = arith.constant 19 : index
    %25 = vector.load %arg1[%c0_23, %c0_24, %c19] : memref<1x4x512xbf16, #tpu.memory_space<vmem>>, vector<1x4x384xbf16>
    %26 = vector.shape_cast %25 : vector<1x4x384xbf16> to vector<4x384xbf16>
    %c4 = arith.constant 4 : index
    %c0_25 = arith.constant 0 : index
    %c0_26 = arith.constant 0 : index
    %27 = vector.load %arg2[%c4, %c0_25, %c0_26] : memref<9x8x4xbf16, #tpu.memory_space<vmem>>, vector<1x8x4xbf16>
    %28 = vector.shape_cast %27 : vector<1x8x4xbf16> to vector<8x4xbf16>
    %cst_27 = arith.constant dense<0.000000e+00> : vector<8x384xf32>
    %29 = tpu.matmul %28, %26, %cst_27 {dimension_numbers = #tpu.dot_dimension_numbers<[1], [0], [0], [1], [0, 0, 1, 1], [], []>} : vector<8x4xbf16>, vector<4x384xbf16>, vector<8x384xf32> -> vector<8x384xf32>
    %30 = arith.addf %24, %29 : vector<8x384xf32>
    %c0_28 = arith.constant 0 : index
    %c0_29 = arith.constant 0 : index
    %c20 = arith.constant 20 : index
    %31 = vector.load %arg1[%c0_28, %c0_29, %c20] : memref<1x4x512xbf16, #tpu.memory_space<vmem>>, vector<1x4x384xbf16>
    %32 = vector.shape_cast %31 : vector<1x4x384xbf16> to vector<4x384xbf16>
    %c5 = arith.constant 5 : index
    %c0_30 = arith.constant 0 : index
    %c0_31 = arith.constant 0 : index
    %33 = vector.load %arg2[%c5, %c0_30, %c0_31] : memref<9x8x4xbf16, #tpu.memory_space<vmem>>, vector<1x8x4xbf16>
    %34 = vector.shape_cast %33 : vector<1x8x4xbf16> to vector<8x4xbf16>
    %cst_32 = arith.constant dense<0.000000e+00> : vector<8x384xf32>
    %35 = tpu.matmul %34, %32, %cst_32 {dimension_numbers = #tpu.dot_dimension_numbers<[1], [0], [0], [1], [0, 0, 1, 1], [], []>} : vector<8x4xbf16>, vector<4x384xbf16>, vector<8x384xf32> -> vector<8x384xf32>
    %36 = arith.addf %30, %35 : vector<8x384xf32>
    %c0_33 = arith.constant 0 : index
    %c0_34 = arith.constant 0 : index
    %c36 = arith.constant 36 : index
    %37 = vector.load %arg1[%c0_33, %c0_34, %c36] : memref<1x4x512xbf16, #tpu.memory_space<vmem>>, vector<1x4x384xbf16>
    %38 = vector.shape_cast %37 : vector<1x4x384xbf16> to vector<4x384xbf16>
    %c6 = arith.constant 6 : index
    %c0_35 = arith.constant 0 : index
    %c0_36 = arith.constant 0 : index
    %39 = vector.load %arg2[%c6, %c0_35, %c0_36] : memref<9x8x4xbf16, #tpu.memory_space<vmem>>, vector<1x8x4xbf16>
    %40 = vector.shape_cast %39 : vector<1x8x4xbf16> to vector<8x4xbf16>
    %cst_37 = arith.constant dense<0.000000e+00> : vector<8x384xf32>
    %41 = tpu.matmul %40, %38, %cst_37 {dimension_numbers = #tpu.dot_dimension_numbers<[1], [0], [0], [1], [0, 0, 1, 1], [], []>} : vector<8x4xbf16>, vector<4x384xbf16>, vector<8x384xf32> -> vector<8x384xf32>
    %42 = arith.addf %36, %41 : vector<8x384xf32>
    %c0_38 = arith.constant 0 : index
    %c0_39 = arith.constant 0 : index
    %c37 = arith.constant 37 : index
    %43 = vector.load %arg1[%c0_38, %c0_39, %c37] : memref<1x4x512xbf16, #tpu.memory_space<vmem>>, vector<1x4x384xbf16>
    %44 = vector.shape_cast %43 : vector<1x4x384xbf16> to vector<4x384xbf16>
    %c7 = arith.constant 7 : index
    %c0_40 = arith.constant 0 : index
    %c0_41 = arith.constant 0 : index
    %45 = vector.load %arg2[%c7, %c0_40, %c0_41] : memref<9x8x4xbf16, #tpu.memory_space<vmem>>, vector<1x8x4xbf16>
    %46 = vector.shape_cast %45 : vector<1x8x4xbf16> to vector<8x4xbf16>
    %cst_42 = arith.constant dense<0.000000e+00> : vector<8x384xf32>
    %47 = tpu.matmul %46, %44, %cst_42 {dimension_numbers = #tpu.dot_dimension_numbers<[1], [0], [0], [1], [0, 0, 1, 1], [], []>} : vector<8x4xbf16>, vector<4x384xbf16>, vector<8x384xf32> -> vector<8x384xf32>
    %48 = arith.addf %42, %47 : vector<8x384xf32>
    %c0_43 = arith.constant 0 : index
    %c0_44 = arith.constant 0 : index
    %c38 = arith.constant 38 : index
    %49 = vector.load %arg1[%c0_43, %c0_44, %c38] : memref<1x4x512xbf16, #tpu.memory_space<vmem>>, vector<1x4x384xbf16>
    %50 = vector.shape_cast %49 : vector<1x4x384xbf16> to vector<4x384xbf16>
    %c8 = arith.constant 8 : index
    %c0_45 = arith.constant 0 : index
    %c0_46 = arith.constant 0 : index
    %51 = vector.load %arg2[%c8, %c0_45, %c0_46] : memref<9x8x4xbf16, #tpu.memory_space<vmem>>, vector<1x8x4xbf16>
    %52 = vector.shape_cast %51 : vector<1x8x4xbf16> to vector<8x4xbf16>
    %cst_47 = arith.constant dense<0.000000e+00> : vector<8x384xf32>
    %53 = tpu.matmul %52, %50, %cst_47 {dimension_numbers = #tpu.dot_dimension_numbers<[1], [0], [0], [1], [0, 0, 1, 1], [], []>} : vector<8x4xbf16>, vector<4x384xbf16>, vector<8x384xf32> -> vector<8x384xf32>
    %54 = arith.addf %48, %53 : vector<8x384xf32>
    %c0_48 = arith.constant 0 : index
    %c0_49 = arith.constant 0 : index
    %55 = vector.load %arg3[%c0_48, %c0_49] : memref<1x384xf32, #tpu.memory_space<vmem>>, vector<1x384xf32>
    %56 = vector.broadcast %55 : vector<1x384xf32> to vector<8x384xf32>
    %57 = arith.mulf %54, %56 : vector<8x384xf32>
    %cst_50 = arith.constant dense<0.000000e+00> : vector<8xf32>
    %58 = vector.multi_reduction <add>, %57, %cst_50 [1] : vector<8x384xf32> to vector<8xf32>
    %59 = vector.shape_cast %58 : vector<8xf32> to vector<8x1xf32>
    %60 = vector.shape_cast %59 : vector<8x1xf32> to vector<1x8x1xf32>
    %c0_51 = arith.constant 0 : index
    %c0_52 = arith.constant 0 : index
    %c0_53 = arith.constant 0 : index
    %61 = vector.load %arg4[%c0_51, %c0_52, %c0_53] : memref<1x8x1xf32, #tpu.memory_space<vmem>>, vector<1x8x1xf32>
    tpu.vector_store %arg4[%c0_51, %c0_52, %c0_53], %60 {strides = array<i32>} : memref<1x8x1xf32, #tpu.memory_space<vmem>>, vector<1x8x1xf32>,
    %62 = arith.mulf %57, %57 : vector<8x384xf32>
    %cst_54 = arith.constant dense<0.000000e+00> : vector<8xf32>
    %63 = vector.multi_reduction <add>, %62, %cst_54 [1] : vector<8x384xf32> to vector<8xf32>
    %64 = vector.shape_cast %63 : vector<8xf32> to vector<8x1xf32>
    %65 = vector.shape_cast %64 : vector<8x1xf32> to vector<1x8x1xf32>
    %c0_55 = arith.constant 0 : index
    %c0_56 = arith.constant 0 : index
    %c0_57 = arith.constant 0 : index
    %66 = vector.load %arg5[%c0_55, %c0_56, %c0_57] : memref<1x8x1xf32, #tpu.memory_space<vmem>>, vector<1x8x1xf32>
    tpu.vector_store %arg5[%c0_55, %c0_56, %c0_57], %65 {strides = array<i32>} : memref<1x8x1xf32, #tpu.memory_space<vmem>>, vector<1x8x1xf32>,
    return
  }
  func.func @transform_0(%arg0: i32) -> (i32, i32, i32) {
    %c0_i32 = arith.constant 0 : i32
    %c0_i32_0 = arith.constant 0 : i32
    %c0_i32_1 = arith.constant 0 : i32
    return %arg0, %c0_i32, %c0_i32_0 : i32, i32, i32
  }
  func.func @transform_1(%arg0: i32) -> (i32, i32, i32) {
    %c0_i32 = arith.constant 0 : i32
    %c0_i32_0 = arith.constant 0 : i32
    %c0_i32_1 = arith.constant 0 : i32
    %c0_i32_2 = arith.constant 0 : i32
    return %c0_i32, %c0_i32_0, %c0_i32_1 : i32, i32, i32
  }
  func.func @transform_2(%arg0: i32) -> (i32, i32) {
    %c0_i32 = arith.constant 0 : i32
    %c0_i32_0 = arith.constant 0 : i32
    %c0_i32_1 = arith.constant 0 : i32
    return %c0_i32, %c0_i32_0 : i32, i32
  }
  func.func @transform_3(%arg0: i32) -> (i32, i32, i32) {
    %c0_i32 = arith.constant 0 : i32
    %c0_i32_0 = arith.constant 0 : i32
    %c0_i32_1 = arith.constant 0 : i32
    return %arg0, %c0_i32, %c0_i32_0 : i32, i32, i32
  }
  func.func @transform_4(%arg0: i32) -> (i32, i32, i32) {
    %c0_i32 = arith.constant 0 : i32
    %c0_i32_0 = arith.constant 0 : i32
    %c0_i32_1 = arith.constant 0 : i32
    return %arg0, %c0_i32, %c0_i32_0 : i32, i32, i32
  }
}

module attributes {stable_mosaic.version = 11 : i64} {
  func.func @_conv_bn_relu_kernel(%arg0: i32, %arg1: memref<1x4x512xbf16, #tpu.memory_space<vmem>>, %arg2: memref<9x8x4xbf16, #tpu.memory_space<vmem>>, %arg3: memref<8x1xf32, #tpu.memory_space<vmem>>, %arg4: memref<8x1xf32, #tpu.memory_space<vmem>>, %arg5: memref<1x8x384xf32, #tpu.memory_space<vmem>>) attributes {dimension_semantics = [#tpu.dimension_semantics<parallel>], iteration_bounds = array<i64: 2>, scalar_prefetch = 0 : i64, scratch_operands = 0 : i64, tpu.core_type = #tpu.core_type<tc>, window_params = [{transform_indices = @transform_0, window_bounds = array<i64: 1, 4, 512>}, {pipeline_mode = #tpu.pipeline_mode<synchronous>, transform_indices = @transform_1, window_bounds = array<i64: 9, 8, 4>}, {pipeline_mode = #tpu.pipeline_mode<synchronous>, transform_indices = @transform_2, window_bounds = array<i64: 8, 1>}, {pipeline_mode = #tpu.pipeline_mode<synchronous>, transform_indices = @transform_3, window_bounds = array<i64: 8, 1>}, {transform_indices = @transform_4, window_bounds = array<i64: 1, 8, 384>}]} {
    %cst = arith.constant 0.000000e+00 : f32
    %0 = vector.broadcast %cst : f32 to vector<8x384xf32>
    %c0 = arith.constant 0 : index
    %c0_0 = arith.constant 0 : index
    %c0_1 = arith.constant 0 : index
    %1 = vector.load %arg1[%c0, %c0_0, %c0_1] : memref<1x4x512xbf16, #tpu.memory_space<vmem>>, vector<1x4x384xbf16>
    %2 = vector.shape_cast %1 : vector<1x4x384xbf16> to vector<4x384xbf16>
    %c0_2 = arith.constant 0 : index
    %c0_3 = arith.constant 0 : index
    %c0_4 = arith.constant 0 : index
    %3 = vector.load %arg2[%c0_2, %c0_3, %c0_4] : memref<9x8x4xbf16, #tpu.memory_space<vmem>>, vector<1x8x4xbf16>
    %4 = vector.shape_cast %3 : vector<1x8x4xbf16> to vector<8x4xbf16>
    %cst_5 = arith.constant dense<0.000000e+00> : vector<8x384xf32>
    %5 = tpu.matmul %4, %2, %cst_5 {dimension_numbers = #tpu.dot_dimension_numbers<[1], [0], [0], [1], [0, 0, 1, 1], [], []>} : vector<8x4xbf16>, vector<4x384xbf16>, vector<8x384xf32> -> vector<8x384xf32>
    %6 = arith.addf %0, %5 : vector<8x384xf32>
    %c0_6 = arith.constant 0 : index
    %c0_7 = arith.constant 0 : index
    %c1 = arith.constant 1 : index
    %7 = vector.load %arg1[%c0_6, %c0_7, %c1] : memref<1x4x512xbf16, #tpu.memory_space<vmem>>, vector<1x4x384xbf16>
    %8 = vector.shape_cast %7 : vector<1x4x384xbf16> to vector<4x384xbf16>
    %c1_8 = arith.constant 1 : index
    %c0_9 = arith.constant 0 : index
    %c0_10 = arith.constant 0 : index
    %9 = vector.load %arg2[%c1_8, %c0_9, %c0_10] : memref<9x8x4xbf16, #tpu.memory_space<vmem>>, vector<1x8x4xbf16>
    %10 = vector.shape_cast %9 : vector<1x8x4xbf16> to vector<8x4xbf16>
    %cst_11 = arith.constant dense<0.000000e+00> : vector<8x384xf32>
    %11 = tpu.matmul %10, %8, %cst_11 {dimension_numbers = #tpu.dot_dimension_numbers<[1], [0], [0], [1], [0, 0, 1, 1], [], []>} : vector<8x4xbf16>, vector<4x384xbf16>, vector<8x384xf32> -> vector<8x384xf32>
    %12 = arith.addf %6, %11 : vector<8x384xf32>
    %c0_12 = arith.constant 0 : index
    %c0_13 = arith.constant 0 : index
    %c2 = arith.constant 2 : index
    %13 = vector.load %arg1[%c0_12, %c0_13, %c2] : memref<1x4x512xbf16, #tpu.memory_space<vmem>>, vector<1x4x384xbf16>
    %14 = vector.shape_cast %13 : vector<1x4x384xbf16> to vector<4x384xbf16>
    %c2_14 = arith.constant 2 : index
    %c0_15 = arith.constant 0 : index
    %c0_16 = arith.constant 0 : index
    %15 = vector.load %arg2[%c2_14, %c0_15, %c0_16] : memref<9x8x4xbf16, #tpu.memory_space<vmem>>, vector<1x8x4xbf16>
    %16 = vector.shape_cast %15 : vector<1x8x4xbf16> to vector<8x4xbf16>
    %cst_17 = arith.constant dense<0.000000e+00> : vector<8x384xf32>
    %17 = tpu.matmul %16, %14, %cst_17 {dimension_numbers = #tpu.dot_dimension_numbers<[1], [0], [0], [1], [0, 0, 1, 1], [], []>} : vector<8x4xbf16>, vector<4x384xbf16>, vector<8x384xf32> -> vector<8x384xf32>
    %18 = arith.addf %12, %17 : vector<8x384xf32>
    %c0_18 = arith.constant 0 : index
    %c0_19 = arith.constant 0 : index
    %c18 = arith.constant 18 : index
    %19 = vector.load %arg1[%c0_18, %c0_19, %c18] : memref<1x4x512xbf16, #tpu.memory_space<vmem>>, vector<1x4x384xbf16>
    %20 = vector.shape_cast %19 : vector<1x4x384xbf16> to vector<4x384xbf16>
    %c3 = arith.constant 3 : index
    %c0_20 = arith.constant 0 : index
    %c0_21 = arith.constant 0 : index
    %21 = vector.load %arg2[%c3, %c0_20, %c0_21] : memref<9x8x4xbf16, #tpu.memory_space<vmem>>, vector<1x8x4xbf16>
    %22 = vector.shape_cast %21 : vector<1x8x4xbf16> to vector<8x4xbf16>
    %cst_22 = arith.constant dense<0.000000e+00> : vector<8x384xf32>
    %23 = tpu.matmul %22, %20, %cst_22 {dimension_numbers = #tpu.dot_dimension_numbers<[1], [0], [0], [1], [0, 0, 1, 1], [], []>} : vector<8x4xbf16>, vector<4x384xbf16>, vector<8x384xf32> -> vector<8x384xf32>
    %24 = arith.addf %18, %23 : vector<8x384xf32>
    %c0_23 = arith.constant 0 : index
    %c0_24 = arith.constant 0 : index
    %c19 = arith.constant 19 : index
    %25 = vector.load %arg1[%c0_23, %c0_24, %c19] : memref<1x4x512xbf16, #tpu.memory_space<vmem>>, vector<1x4x384xbf16>
    %26 = vector.shape_cast %25 : vector<1x4x384xbf16> to vector<4x384xbf16>
    %c4 = arith.constant 4 : index
    %c0_25 = arith.constant 0 : index
    %c0_26 = arith.constant 0 : index
    %27 = vector.load %arg2[%c4, %c0_25, %c0_26] : memref<9x8x4xbf16, #tpu.memory_space<vmem>>, vector<1x8x4xbf16>
    %28 = vector.shape_cast %27 : vector<1x8x4xbf16> to vector<8x4xbf16>
    %cst_27 = arith.constant dense<0.000000e+00> : vector<8x384xf32>
    %29 = tpu.matmul %28, %26, %cst_27 {dimension_numbers = #tpu.dot_dimension_numbers<[1], [0], [0], [1], [0, 0, 1, 1], [], []>} : vector<8x4xbf16>, vector<4x384xbf16>, vector<8x384xf32> -> vector<8x384xf32>
    %30 = arith.addf %24, %29 : vector<8x384xf32>
    %c0_28 = arith.constant 0 : index
    %c0_29 = arith.constant 0 : index
    %c20 = arith.constant 20 : index
    %31 = vector.load %arg1[%c0_28, %c0_29, %c20] : memref<1x4x512xbf16, #tpu.memory_space<vmem>>, vector<1x4x384xbf16>
    %32 = vector.shape_cast %31 : vector<1x4x384xbf16> to vector<4x384xbf16>
    %c5 = arith.constant 5 : index
    %c0_30 = arith.constant 0 : index
    %c0_31 = arith.constant 0 : index
    %33 = vector.load %arg2[%c5, %c0_30, %c0_31] : memref<9x8x4xbf16, #tpu.memory_space<vmem>>, vector<1x8x4xbf16>
    %34 = vector.shape_cast %33 : vector<1x8x4xbf16> to vector<8x4xbf16>
    %cst_32 = arith.constant dense<0.000000e+00> : vector<8x384xf32>
    %35 = tpu.matmul %34, %32, %cst_32 {dimension_numbers = #tpu.dot_dimension_numbers<[1], [0], [0], [1], [0, 0, 1, 1], [], []>} : vector<8x4xbf16>, vector<4x384xbf16>, vector<8x384xf32> -> vector<8x384xf32>
    %36 = arith.addf %30, %35 : vector<8x384xf32>
    %c0_33 = arith.constant 0 : index
    %c0_34 = arith.constant 0 : index
    %c36 = arith.constant 36 : index
    %37 = vector.load %arg1[%c0_33, %c0_34, %c36] : memref<1x4x512xbf16, #tpu.memory_space<vmem>>, vector<1x4x384xbf16>
    %38 = vector.shape_cast %37 : vector<1x4x384xbf16> to vector<4x384xbf16>
    %c6 = arith.constant 6 : index
    %c0_35 = arith.constant 0 : index
    %c0_36 = arith.constant 0 : index
    %39 = vector.load %arg2[%c6, %c0_35, %c0_36] : memref<9x8x4xbf16, #tpu.memory_space<vmem>>, vector<1x8x4xbf16>
    %40 = vector.shape_cast %39 : vector<1x8x4xbf16> to vector<8x4xbf16>
    %cst_37 = arith.constant dense<0.000000e+00> : vector<8x384xf32>
    %41 = tpu.matmul %40, %38, %cst_37 {dimension_numbers = #tpu.dot_dimension_numbers<[1], [0], [0], [1], [0, 0, 1, 1], [], []>} : vector<8x4xbf16>, vector<4x384xbf16>, vector<8x384xf32> -> vector<8x384xf32>
    %42 = arith.addf %36, %41 : vector<8x384xf32>
    %c0_38 = arith.constant 0 : index
    %c0_39 = arith.constant 0 : index
    %c37 = arith.constant 37 : index
    %43 = vector.load %arg1[%c0_38, %c0_39, %c37] : memref<1x4x512xbf16, #tpu.memory_space<vmem>>, vector<1x4x384xbf16>
    %44 = vector.shape_cast %43 : vector<1x4x384xbf16> to vector<4x384xbf16>
    %c7 = arith.constant 7 : index
    %c0_40 = arith.constant 0 : index
    %c0_41 = arith.constant 0 : index
    %45 = vector.load %arg2[%c7, %c0_40, %c0_41] : memref<9x8x4xbf16, #tpu.memory_space<vmem>>, vector<1x8x4xbf16>
    %46 = vector.shape_cast %45 : vector<1x8x4xbf16> to vector<8x4xbf16>
    %cst_42 = arith.constant dense<0.000000e+00> : vector<8x384xf32>
    %47 = tpu.matmul %46, %44, %cst_42 {dimension_numbers = #tpu.dot_dimension_numbers<[1], [0], [0], [1], [0, 0, 1, 1], [], []>} : vector<8x4xbf16>, vector<4x384xbf16>, vector<8x384xf32> -> vector<8x384xf32>
    %48 = arith.addf %42, %47 : vector<8x384xf32>
    %c0_43 = arith.constant 0 : index
    %c0_44 = arith.constant 0 : index
    %c38 = arith.constant 38 : index
    %49 = vector.load %arg1[%c0_43, %c0_44, %c38] : memref<1x4x512xbf16, #tpu.memory_space<vmem>>, vector<1x4x384xbf16>
    %50 = vector.shape_cast %49 : vector<1x4x384xbf16> to vector<4x384xbf16>
    %c8 = arith.constant 8 : index
    %c0_45 = arith.constant 0 : index
    %c0_46 = arith.constant 0 : index
    %51 = vector.load %arg2[%c8, %c0_45, %c0_46] : memref<9x8x4xbf16, #tpu.memory_space<vmem>>, vector<1x8x4xbf16>
    %52 = vector.shape_cast %51 : vector<1x8x4xbf16> to vector<8x4xbf16>
    %cst_47 = arith.constant dense<0.000000e+00> : vector<8x384xf32>
    %53 = tpu.matmul %52, %50, %cst_47 {dimension_numbers = #tpu.dot_dimension_numbers<[1], [0], [0], [1], [0, 0, 1, 1], [], []>} : vector<8x4xbf16>, vector<4x384xbf16>, vector<8x384xf32> -> vector<8x384xf32>
    %54 = arith.addf %48, %53 : vector<8x384xf32>
    %c0_48 = arith.constant 0 : index
    %c0_49 = arith.constant 0 : index
    %55 = vector.load %arg3[%c0_48, %c0_49] : memref<8x1xf32, #tpu.memory_space<vmem>>, vector<8x1xf32>
    %56 = vector.broadcast %55 : vector<8x1xf32> to vector<8x384xf32>
    %57 = arith.mulf %54, %56 : vector<8x384xf32>
    %c0_50 = arith.constant 0 : index
    %c0_51 = arith.constant 0 : index
    %58 = vector.load %arg4[%c0_50, %c0_51] : memref<8x1xf32, #tpu.memory_space<vmem>>, vector<8x1xf32>
    %59 = vector.broadcast %58 : vector<8x1xf32> to vector<8x384xf32>
    %60 = arith.addf %57, %59 : vector<8x384xf32>
    %cst_52 = arith.constant 0.000000e+00 : f32
    %61 = vector.broadcast %cst_52 : f32 to vector<8x384xf32>
    %62 = arith.maximumf %60, %61 : vector<8x384xf32>
    %63 = vector.shape_cast %62 : vector<8x384xf32> to vector<1x8x384xf32>
    %c0_53 = arith.constant 0 : index
    %c0_54 = arith.constant 0 : index
    %c0_55 = arith.constant 0 : index
    %64 = vector.load %arg5[%c0_53, %c0_54, %c0_55] : memref<1x8x384xf32, #tpu.memory_space<vmem>>, vector<1x8x384xf32>
    tpu.vector_store %arg5[%c0_53, %c0_54, %c0_55], %63 {strides = array<i32>} : memref<1x8x384xf32, #tpu.memory_space<vmem>>, vector<1x8x384xf32>,
    return
  }
  func.func @transform_0(%arg0: i32) -> (i32, i32, i32) {
    %c0_i32 = arith.constant 0 : i32
    %c0_i32_0 = arith.constant 0 : i32
    %c0_i32_1 = arith.constant 0 : i32
    return %arg0, %c0_i32, %c0_i32_0 : i32, i32, i32
  }
  func.func @transform_1(%arg0: i32) -> (i32, i32, i32) {
    %c0_i32 = arith.constant 0 : i32
    %c0_i32_0 = arith.constant 0 : i32
    %c0_i32_1 = arith.constant 0 : i32
    %c0_i32_2 = arith.constant 0 : i32
    return %c0_i32, %c0_i32_0, %c0_i32_1 : i32, i32, i32
  }
  func.func @transform_2(%arg0: i32) -> (i32, i32) {
    %c0_i32 = arith.constant 0 : i32
    %c0_i32_0 = arith.constant 0 : i32
    %c0_i32_1 = arith.constant 0 : i32
    return %c0_i32, %c0_i32_0 : i32, i32
  }
  func.func @transform_3(%arg0: i32) -> (i32, i32) {
    %c0_i32 = arith.constant 0 : i32
    %c0_i32_0 = arith.constant 0 : i32
    %c0_i32_1 = arith.constant 0 : i32
    return %c0_i32, %c0_i32_0 : i32, i32
  }
  func.func @transform_4(%arg0: i32) -> (i32, i32, i32) {
    %c0_i32 = arith.constant 0 : i32
    %c0_i32_0 = arith.constant 0 : i32
    %c0_i32_1 = arith.constant 0 : i32
    return %arg0, %c0_i32, %c0_i32_0 : i32, i32, i32
  }
}

</mosaic_0001>

<llo_original>
// kernel: conv_block.2
$region0: #{conv_block.2}
  #allocation0 [shape = 'u32[]', space=smem, size = 0x4, offset = 0x4, fixed_abs, tag = 'smem constant byte address 0x4 - core index']
  #allocation1 [shape = 'u32[144,128]{1,0:T(1,128)}', space=vmem, size = 0x12000, scoped, tag = 'internal scratch']
  %s0 = inlined_call_operand.vmem [shape: bf16[2,4,512], index: 0, kind: input, shape index: {}]
  %s1 = inlined_call_operand.vmem [shape: bf16[9,8,4], index: 1, kind: input, shape index: {}]
  %s2 = inlined_call_operand.vmem [shape: f32[1,384], index: 2, kind: input, shape index: {}]
  %s3 = inlined_call_operand.vmem [shape: f32[2,8,1], index: 3, kind: output, shape index: {0}]
  %s4 = inlined_call_operand.vmem [shape: f32[2,8,1], index: 4, kind: output, shape index: {1}]
  %5 = xla_tuple %s3, %s4
  %s6 = sld [smem:[#allocation0]]
  $region53: #{conv_block.2} parent=0
    _
  %s8 = ssub.s32 1, %s6
  %s9 = scalar_select 0, %s8, %s6
  loop: start=0, step=1, limit=4
  $region2: #{conv_block.2} parent=0 // loop_pre_header
    _
  $region3: #{conv_block.2} parent=0 // loop_header
    %s11 = sphi 0, %s15
    %p12 = scmp.ge.s32.totalorder %s11, 4
    %s21 = sphi 0, %s23
    %s24 = sphi 0, %s21
    %s25 = sphi 0, %s24
    %s41 = sphi 0, %s25
    %s45 = sphi 0, %s45
    %s47 = sphi 0, %s45
    %s48 = sphi 0, %s47
    %s62 = sphi 0, %s48
    %s66 = sphi 0, %s66
    %s68 = sphi 0, %s66
    %s69 = sphi 0, %s68
    %s83 = sphi 0, %s69
    %s89 = sphi 0, %s91
    %s92 = sphi 0, %s89
    %s93 = sphi 0, %s92
    %s109 = sphi 0, %s93
    %s115 = sphi 0, %s117
    %s118 = sphi 0, %s115
    %s119 = sphi 0, %s118
    %s135 = sphi 0, %s119
  $region4: #{conv_block.2} parent=0 // loop_header_branch
    %14 = sbr.rel (%p12) target = $region8
  $region5: #{conv_block.2} parent=0 // loop_body
    %s16 = ssub.s32 %s11, 1
    %s17 = ssub.s32 %s11, 2
    %s18 = sadd.s32 %s11, 1
    %s19 = ssub.s32 %s11, %s18
    %p20 = scmp.eq.s32.totalorder %s19, 0
    %s22 = sadd.s32 %s21, 1
    %s23 = scalar_select %p20, %s21, %s22
    %p26 = pneg %p20
    %p27 = scmp.eq.s32.totalorder %s11, 1
    %p28 = por %p26, %p27
    %p29 = scmp.ne.s32.totalorder %s21, %s24
    %p30 = scmp.eq.s32.totalorder %s11, 0
    %p31 = por %p29, %p30
    %p32 = scmp.ne.s32.totalorder %s21, %s24
    %p33 = scmp.eq.s32.totalorder %s16, 1
    %p34 = por %p32, %p33
    %p35 = scmp.ne.s32.totalorder %s24, %s25
    %p36 = scmp.eq.s32.totalorder %s16, 0
    %p37 = por %p35, %p36
    %p38 = scmp.ne.s32.totalorder %s24, %s25
    %p39 = scmp.eq.s32.totalorder %s17, 1
    %p40 = por %p38, %p39
    %p42 = scmp.ne.s32.totalorder %s25, %s41
    %p43 = scmp.eq.s32.totalorder %s17, 0
    %p44 = por %p42, %p43
    %s46 = sadd.s32 %s45, 1
    %p49 = scmp.eq.s32.totalorder %s11, 1
    %p50 = scmp.ne.s32.totalorder %s45, %s47
    %p51 = scmp.eq.s32.totalorder %s11, 0
    %p52 = por %p50, %p51
    %p53 = scmp.ne.s32.totalorder %s45, %s47
    %p54 = scmp.eq.s32.totalorder %s16, 1
    %p55 = por %p53, %p54
    %p56 = scmp.ne.s32.totalorder %s47, %s48
    %p57 = scmp.eq.s32.totalorder %s16, 0
    %p58 = por %p56, %p57
    %p59 = scmp.ne.s32.totalorder %s47, %s48
    %p60 = scmp.eq.s32.totalorder %s17, 1
    %p61 = por %p59, %p60
    %p63 = scmp.ne.s32.totalorder %s48, %s62
    %p64 = scmp.eq.s32.totalorder %s17, 0
    %p65 = por %p63, %p64
    %s67 = sadd.s32 %s66, 1
    %p70 = scmp.eq.s32.totalorder %s11, 1
    %p71 = scmp.ne.s32.totalorder %s66, %s68
    %p72 = scmp.eq.s32.totalorder %s11, 0
    %p73 = por %p71, %p72
    %p74 = scmp.ne.s32.totalorder %s66, %s68
    %p75 = scmp.eq.s32.totalorder %s16, 1
    %p76 = por %p74, %p75
    %p77 = scmp.ne.s32.totalorder %s68, %s69
    %p78 = scmp.eq.s32.totalorder %s16, 0
    %p79 = por %p77, %p78
    %p80 = scmp.ne.s32.totalorder %s68, %s69
    %p81 = scmp.eq.s32.totalorder %s17, 1
    %p82 = por %p80, %p81
    %p84 = scmp.ne.s32.totalorder %s69, %s83
    %p85 = scmp.eq.s32.totalorder %s17, 0
    %p86 = por %p84, %p85
    %s87 = ssub.s32 %s11, %s18
    %p88 = scmp.eq.s32.totalorder %s87, 0
    %s90 = sadd.s32 %s89, 1
    %s91 = scalar_select %p88, %s89, %s90
    %p94 = pneg %p88
    %p95 = scmp.eq.s32.totalorder %s11, 1
    %p96 = por %p94, %p95
    %p97 = scmp.ne.s32.totalorder %s89, %s92
    %p98 = scmp.eq.s32.totalorder %s11, 0
    %p99 = por %p97, %p98
    %p100 = scmp.ne.s32.totalorder %s89, %s92
    %p101 = scmp.eq.s32.totalorder %s16, 1
    %p102 = por %p100, %p101
    %p103 = scmp.ne.s32.totalorder %s92, %s93
    %p104 = scmp.eq.s32.totalorder %s16, 0
    %p105 = por %p103, %p104
    %p106 = scmp.ne.s32.totalorder %s92, %s93
    %p107 = scmp.eq.s32.totalorder %s17, 1
    %p108 = por %p106, %p107
    %p110 = scmp.ne.s32.totalorder %s93, %s109
    %p111 = scmp.eq.s32.totalorder %s17, 0
    %p112 = por %p110, %p111
    %s113 = ssub.s32 %s11, %s18
    %p114 = scmp.eq.s32.totalorder %s113, 0
    %s116 = sadd.s32 %s115, 1
    %s117 = scalar_select %p114, %s115, %s116
    %p120 = pneg %p114
    %p121 = scmp.eq.s32.totalorder %s11, 1
    %p122 = por %p120, %p121
    %p123 = scmp.ne.s32.totalorder %s115, %s118
    %p124 = scmp.eq.s32.totalorder %s11, 0
    %p125 = por %p123, %p124
    %p126 = scmp.ne.s32.totalorder %s115, %s118
    %p127 = scmp.eq.s32.totalorder %s16, 1
    %p128 = por %p126, %p127
    %p129 = scmp.ne.s32.totalorder %s118, %s119
    %p130 = scmp.eq.s32.totalorder %s16, 0
    %p131 = por %p129, %p130
    %p132 = scmp.ne.s32.totalorder %s118, %s119
    %p133 = scmp.eq.s32.totalorder %s17, 1
    %p134 = por %p132, %p133
    %p136 = scmp.ne.s32.totalorder %s119, %s135
    %p137 = scmp.eq.s32.totalorder %s17, 0
    %p138 = por %p136, %p137
    %p139 = scmp.le.s32.totalorder 1, %s11
    %p140 = scmp.lt.s32.totalorder %s11, 3
    %p141 = pnand %p139, %p140
    %p142 = pneg %p141
    // Predicated region
    $region9: #{conv_block.2} parent=5 // pred_check
      _
    $region10: #{conv_block.2} parent=5 // pred_check_branch
      %144 = sbr.rel (%p141) target = $region12
    $region11: #{conv_block.2} parent=5 // pred_region
      %s145 = ssub.s32 %s11, 1
      // Predicated region
      $region13: #{conv_block.2} parent=11 // pred_check
        %p146 = pneg %p58
      $region14: #{conv_block.2} parent=11 // pred_check_branch
        %148 = sbr.rel (%p146) target = $region16
      $region15: #{conv_block.2} parent=11 // pred_region
        _
      $region16: #{conv_block.2} parent=11 // pred_fallthru
        _
      // Predicated region
      $region17: #{conv_block.2} parent=11 // pred_check
        %p149 = pneg %p79
      $region18: #{conv_block.2} parent=11 // pred_check_branch
        %151 = sbr.rel (%p149) target = $region20
      $region19: #{conv_block.2} parent=11 // pred_region
        _
      $region20: #{conv_block.2} parent=11 // pred_fallthru
        _
    $region12: #{conv_block.2} parent=5 // pred_fallthru
      _
    %p152 = scmp.lt.s32.totalorder %s11, 2
    // Predicated region
    $region21: #{conv_block.2} parent=5 // pred_check
      %p153 = pneg %p152
    $region22: #{conv_block.2} parent=5 // pred_check_branch
      %155 = sbr.rel (%p153) target = $region24
    $region23: #{conv_block.2} parent=5 // pred_region
      // Predicated region
      $region25: #{conv_block.2} parent=23 // pred_check
        %p156 = pneg %p31
      $region26: #{conv_block.2} parent=23 // pred_check_branch
        %158 = sbr.rel (%p156) target = $region28
      $region27: #{conv_block.2} parent=23 // pred_region
        %p159 = scmp.lt.s32.totalorder %s11, 1
        %s160 = scalar_select %p159, %s11, 1
        %s161 = smul.addr %s160, 4
        %s162 = smul.addr %s161, 2
        %s163 = scalar_lea.vmem %s0, %s162
      $region28: #{conv_block.2} parent=23 // pred_fallthru
        _
    $region24: #{conv_block.2} parent=5 // pred_fallthru
      _
    %p164 = scmp.le.s32.totalorder 1, %s11
    %p165 = scmp.lt.s32.totalorder %s11, 3
    %p166 = pnand %p164, %p165
    %p167 = pneg %p166
    // Predicated region
    $region29: #{conv_block.2} parent=5 // pred_check
      _
    $region30: #{conv_block.2} parent=5 // pred_check_branch
      %169 = sbr.rel (%p166) target = $region32
    $region31: #{conv_block.2} parent=5 // pred_region
      %s170 = ssub.s32 %s11, 1
      %p171 = scmp.lt.s32.totalorder %s16, 1
      %s172 = scalar_select %p171, %s16, 1
      %s173 = smul.addr %s172, 4
      %s174 = smul.addr %s173, 2
      %s175 = scalar_lea.vmem %s0, %s174
      %p176 = pneg %p37
      %p177 = pneg %p34
      %p178 = pneg %p58
      %p179 = pneg %p55
      %p180 = pneg %p79
      %p181 = pneg %p76
      %p182 = pneg %p105
      %p183 = pneg %p102
      %p184 = scmp.lt.s32.totalorder %s16, 1
      %s185 = scalar_select %p184, %s16, 1
      %s186 = smul.addr %s185, 8
      %s187 = scalar_lea.vmem %s3, %s186
      %p188 = pneg %p131
      %p189 = pneg %p128
      %p190 = scmp.lt.s32.totalorder %s16, 1
      %s191 = scalar_select %p190, %s16, 1
      %s192 = smul.addr %s191, 8
      %s193 = scalar_lea.vmem %s4, %s192
      %p194 = scmp.lt.s32.totalorder %s16, 1
      %s195 = scalar_select %p194, %s16, 1
      %s196 = smul.addr %s195, 4
      %s197 = smul.addr %s196, 2
      %s198 = scalar_lea.vmem %s0, %s197
      %p199 = scmp.lt.s32.totalorder %s16, 1
      %s200 = scalar_select %p199, %s16, 1
      %s201 = smul.addr %s200, 8
      %s202 = scalar_lea.vmem %s3, %s201
      %p203 = scmp.lt.s32.totalorder %s16, 1
      %s204 = scalar_select %p203, %s16, 1
      %s205 = smul.addr %s204, 8
      %s206 = scalar_lea.vmem %s4, %s205
      %v208 = vld [vmem:[%s198] sm:$0x3f]
      %v209 = vld [vmem:[%s1] sm:$0xf]
      %v210 = vld [vmem:[%s198] sm:$0xff]
      %s211 = scalar_lea.vmem %s1, 4
      %v212 = vld [vmem:[%s211] sm:$0xf]
      %v214 = vcombine.high %v210, %v210
      %v216 = vunpack.c.l.s4 1983009808
      %v217 = vunpack.c.0.s8 %v216
      %v218 = vlaneseq
      %v219 = vshrl.u32 %v218, 7
      %v220 = vsub.s32 %v217, %v219
      %v221 = vrot.slane %v210, %v220
      %v223 = vunpack.c.l.s4 1983009808
      %v224 = vunpack.c.0.s8 %v223
      %v225 = vlaneseq
      %v226 = vshrl.u32 %v225, 7
      %v227 = vsub.s32 %v224, %v226
      %v228 = vrot.slane %v214, %v227
      %v229 = vcombine.high %v221, %v221
      %v230 = vcombine.high %v228, %v228
      %231 = vrot.lane.b32.xlu0 %v221, 127
      %v232 = vpop.permute.xlu0 %231
      %233 = vrot.lane.b32.xlu0 %v229, 127
      %v234 = vpop.permute.xlu0 %233
      %235 = vrot.lane.b32.xlu0 %v228, 127
      %v236 = vpop.permute.xlu0 %235
      %237 = vrot.lane.b32.xlu0 %v230, 127
      %v238 = vpop.permute.xlu0 %237
      %vm239 = vcmask 1039360
      %v240 = vsel %vm239, %v232, %v234
      %v241 = vsel %vm239, %v234, %v236
      %v242 = vsel %vm239, %v236, %v238
      %vm243 = vcmask 31744
      %v245 = vsel %vm243, %v212, 0
      %vm247 = vcmask 1041408
      %v249 = vsel %vm247, %v240, 0
      %v252 = vsel %vm247, %v241, 0
      %v255 = vsel %vm247, %v242, 0
      %257 = vmatprep.subr.bf16.mxu0 0
      %258 = vmatpush1.bf16.msra.mxu0 0
      %259 = vmatprep.subr.bf16.mxu0 0
      %260 = vmatpush1.bf16.msra.mxu0 0
      %261 = vmatprep.subr.bf16.mxu0 0
      %262 = vmatpush1.bf16.msra.mxu0 0
      %263 = vmatprep.subr.bf16.mxu0 0
      %264 = vmatpush1.bf16.msra.mxu0 0
      %265 = vmatprep.subr.bf16.mxu0 0
      %266 = vmatpush1.bf16.msra.mxu0 0
      %267 = vmatprep.subr.bf16.mxu0 0
      %268 = vmatpush1.bf16.msra.mxu0 0
      %269 = vmatprep.subr.bf16.mxu0 0
      %270 = vmatpush1.bf16.msra.mxu0 0
      %271 = vmatprep.subr.bf16.mxu0 %v252
      %272 = vmatpush1.bf16.msra.mxu0 %v249
      %273 = vmatprep.subr.bf16.mxu0 0
      %274 = vmatpush2.bf16.msra.mxu0 0
      %275 = vmatprep.subr.bf16.mxu0 0
      %276 = vmatpush2.bf16.msra.mxu0 0
      %277 = vmatprep.subr.bf16.mxu0 0
      %278 = vmatpush2.bf16.msra.mxu0 0
      %279 = vmatprep.subr.bf16.mxu0 0
      %280 = vmatpush2.bf16.msra.mxu0 0
      %281 = vmatprep.subr.bf16.mxu0 0
      %282 = vmatpush2.bf16.msra.mxu0 0
      %283 = vmatprep.subr.bf16.mxu0 0
      %284 = vmatpush2.bf16.msra.mxu0 0
      %285 = vmatprep.subr.bf16.mxu0 0
      %286 = vmatpush2.bf16.msra.mxu0 0
      %287 = vmatprep.subr.bf16.mxu0 0
      %288 = vmatpush2.bf16.msra.mxu0 0
      %289 = vmatprep.mubr.bf16.mxu0 0
      %290 = vmatmul.mubr.bf16.gmra.mxu0 %v245
      %v291 = vpop.f32.mrf.mxu0
      %v292 = vadd.f32 0.0, %v291
      %v293 = vpop.f32.mrf.mxu0
      %v294 = vadd.f32 0.0, %v293
      %v295 = vpop.f32.mrf.mxu0
      %v296 = vpop.f32.mrf.mxu0
      %297 = vdwg.mxu0
      %298 = vmatprep.subr.bf16.mxu0 0
      %299 = vmatpush1.bf16.msra.mxu0 0
      %300 = vmatprep.subr.bf16.mxu0 0
      %301 = vmatpush1.bf16.msra.mxu0 0
      %302 = vmatprep.subr.bf16.mxu0 0
      %303 = vmatpush1.bf16.msra.mxu0 0
      %304 = vmatprep.subr.bf16.mxu0 0
      %305 = vmatpush1.bf16.msra.mxu0 0
      %306 = vmatprep.subr.bf16.mxu0 0
      %307 = vmatpush1.bf16.msra.mxu0 0
      %308 = vmatprep.subr.bf16.mxu0 0
      %309 = vmatpush1.bf16.msra.mxu0 0
      %310 = vmatprep.subr.bf16.mxu0 0
      %311 = vmatpush1.bf16.msra.mxu0 0
      %312 = vmatprep.subr.bf16.mxu0 0
      %313 = vmatpush1.bf16.msra.mxu0 %v255
      %314 = vmatprep.subr.bf16.mxu0 0
      %315 = vmatpush2.bf16.msra.mxu0 0
      %316 = vmatprep.subr.bf16.mxu0 0
      %317 = vmatpush2.bf16.msra.mxu0 0
      %318 = vmatprep.subr.bf16.mxu0 0
      %319 = vmatpush2.bf16.msra.mxu0 0
      %320 = vmatprep.subr.bf16.mxu0 0
      %321 = vmatpush2.bf16.msra.mxu0 0
      %322 = vmatprep.subr.bf16.mxu0 0
      %323 = vmatpush2.bf16.msra.mxu0 0
      %324 = vmatprep.subr.bf16.mxu0 0
      %325 = vmatpush2.bf16.msra.mxu0 0
      %326 = vmatprep.subr.bf16.mxu0 0
      %327 = vmatpush2.bf16.msra.mxu0 0
      %328 = vmatprep.subr.bf16.mxu0 0
      %329 = vmatpush2.bf16.msra.mxu0 0
      %330 = vmatprep.mubr.bf16.mxu0 0
      %331 = vmatmul.mubr.bf16.gmra.mxu0 %v245
      %v332 = vpop.f32.mrf.mxu0
      %v333 = vadd.f32 0.0, %v332
      %v334 = vpop.f32.mrf.mxu0
      %v335 = vpop.f32.mrf.mxu0
      %v336 = vpop.f32.mrf.mxu0
      %337 = vdwg.mxu0
      %v339 = vcombine.high %v208, %v208
      %v341 = vunpack.c.l.s4 1983009808
      %v342 = vunpack.c.0.s8 %v341
      %v343 = vlaneseq
      %v344 = vshrl.u32 %v343, 7
      %v345 = vsub.s32 %v342, %v344
      %v346 = vrot.slane %v208, %v345
      %v348 = vunpack.c.l.s4 1983009808
      %v349 = vunpack.c.0.s8 %v348
      %v350 = vlaneseq
      %v351 = vshrl.u32 %v350, 7
      %v352 = vsub.s32 %v349, %v351
      %v353 = vrot.slane %v339, %v352
      %v354 = vcombine.high %v346, %v346
      %v356 = vsel %vm243, %v209, 0
      %v359 = vsel %vm247, %v346, 0
      %v362 = vsel %vm247, %v354, 0
      %v365 = vsel %vm247, %v353, 0
      %367 = vmatprep.subr.bf16.mxu0 0
      %368 = vmatpush1.bf16.msra.mxu0 0
      %369 = vmatprep.subr.bf16.mxu0 0
      %370 = vmatpush1.bf16.msra.mxu0 0
      %371 = vmatprep.subr.bf16.mxu0 0
      %372 = vmatpush1.bf16.msra.mxu0 0
      %373 = vmatprep.subr.bf16.mxu0 0
      %374 = vmatpush1.bf16.msra.mxu0 0
      %375 = vmatprep.subr.bf16.mxu0 0
      %376 = vmatpush1.bf16.msra.mxu0 0
      %377 = vmatprep.subr.bf16.mxu0 0
      %378 = vmatpush1.bf16.msra.mxu0 0
      %379 = vmatprep.subr.bf16.mxu0 0
      %380 = vmatpush1.bf16.msra.mxu0 0
      %381 = vmatprep.subr.bf16.mxu0 %v362
      %382 = vmatpush1.bf16.msra.mxu0 %v359
      %383 = vmatprep.subr.bf16.mxu0 0
      %384 = vmatpush2.bf16.msra.mxu0 0
      %385 = vmatprep.subr.bf16.mxu0 0
      %386 = vmatpush2.bf16.msra.mxu0 0
      %387 = vmatprep.subr.bf16.mxu0 0
      %388 = vmatpush2.bf16.msra.mxu0 0
      %389 = vmatprep.subr.bf16.mxu0 0
      %390 = vmatpush2.bf16.msra.mxu0 0
      %391 = vmatprep.subr.bf16.mxu0 0
      %392 = vmatpush2.bf16.msra.mxu0 0
      %393 = vmatprep.subr.bf16.mxu0 0
      %394 = vmatpush2.bf16.msra.mxu0 0
      %395 = vmatprep.subr.bf16.mxu0 0
      %396 = vmatpush2.bf16.msra.mxu0 0
      %397 = vmatprep.subr.bf16.mxu0 0
      %398 = vmatpush2.bf16.msra.mxu0 0
      %399 = vmatprep.mubr.bf16.mxu0 0
      %400 = vmatmul.mubr.bf16.gmra.mxu0 %v356
      %v401 = vpop.f32.mrf.mxu0
      %v402 = vadd.f32 %v292, %v401
      %v403 = vpop.f32.mrf.mxu0
      %v404 = vadd.f32 %v294, %v403
      %v405 = vpop.f32.mrf.mxu0
      %v406 = vpop.f32.mrf.mxu0
      %407 = vdwg.mxu0
      %408 = vmatprep.subr.bf16.mxu0 0
      %409 = vmatpush1.bf16.msra.mxu0 0
      %410 = vmatprep.subr.bf16.mxu0 0
      %411 = vmatpush1.bf16.msra.mxu0 0
      %412 = vmatprep.subr.bf16.mxu0 0
      %413 = vmatpush1.bf16.msra.mxu0 0
      %414 = vmatprep.subr.bf16.mxu0 0
      %415 = vmatpush1.bf16.msra.mxu0 0
      %416 = vmatprep.subr.bf16.mxu0 0
      %417 = vmatpush1.bf16.msra.mxu0 0
      %418 = vmatprep.subr.bf16.mxu0 0
      %419 = vmatpush1.bf16.msra.mxu0 0
      %420 = vmatprep.subr.bf16.mxu0 0
      %421 = vmatpush1.bf16.msra.mxu0 0
      %422 = vmatprep.subr.bf16.mxu0 0
      %423 = vmatpush1.bf16.msra.mxu0 %v365
      %424 = vmatprep.subr.bf16.mxu0 0
      %425 = vmatpush2.bf16.msra.mxu0 0
      %426 = vmatprep.subr.bf16.mxu0 0
      %427 = vmatpush2.bf16.msra.mxu0 0
      %428 = vmatprep.subr.bf16.mxu0 0
      %429 = vmatpush2.bf16.msra.mxu0 0
      %430 = vmatprep.subr.bf16.mxu0 0
      %431 = vmatpush2.bf16.msra.mxu0 0
      %432 = vmatprep.subr.bf16.mxu0 0
      %433 = vmatpush2.bf16.msra.mxu0 0
      %434 = vmatprep.subr.bf16.mxu0 0
      %435 = vmatpush2.bf16.msra.mxu0 0
      %436 = vmatprep.subr.bf16.mxu0 0
      %437 = vmatpush2.bf16.msra.mxu0 0
      %438 = vmatprep.subr.bf16.mxu0 0
      %439 = vmatpush2.bf16.msra.mxu0 0
      %440 = vmatprep.mubr.bf16.mxu0 0
      %441 = vmatmul.mubr.bf16.gmra.mxu0 %v356
      %v442 = vpop.f32.mrf.mxu0
      %v443 = vadd.f32 %v333, %v442
      %v444 = vpop.f32.mrf.mxu0
      %v445 = vpop.f32.mrf.mxu0
      %v446 = vpop.f32.mrf.mxu0
      %447 = vdwg.mxu0
      %v448 = vld [vmem:[%s198] sm:$0xff]
      %s449 = scalar_lea.vmem %s1, 8
      %v450 = vld [vmem:[%s449] sm:$0xf]
      %v452 = vcombine.high %v448, %v448
      %v454 = vunpack.c.l.s4 1983009808
      %v455 = vunpack.c.0.s8 %v454
      %v456 = vlaneseq
      %v457 = vshrl.u32 %v456, 7
      %v458 = vsub.s32 %v455, %v457
      %v459 = vrot.slane %v448, %v458
      %v461 = vunpack.c.l.s4 1983009808
      %v462 = vunpack.c.0.s8 %v461
      %v463 = vlaneseq
      %v464 = vshrl.u32 %v463, 7
      %v465 = vsub.s32 %v462, %v464
      %v466 = vrot.slane %v452, %v465
      %v467 = vcombine.high %v459, %v459
      %v468 = vcombine.high %v466, %v466
      %469 = vrot.lane.b32.xlu0 %v459, 126
      %v470 = vpop.permute.xlu0 %469
      %471 = vrot.lane.b32.xlu0 %v467, 126
      %v472 = vpop.permute.xlu0 %471
      %473 = vrot.lane.b32.xlu0 %v466, 126
      %v474 = vpop.permute.xlu0 %473
      %475 = vrot.lane.b32.xlu0 %v468, 126
      %v476 = vpop.permute.xlu0 %475
      %vm477 = vcmask 1031168
      %v478 = vsel %vm477, %v470, %v472
      %v479 = vsel %vm477, %v472, %v474
      %v480 = vsel %vm477, %v474, %v476
      %v482 = vsel %vm243, %v450, 0
      %v485 = vsel %vm247, %v478, 0
      %v488 = vsel %vm247, %v479, 0
      %v491 = vsel %vm247, %v480, 0
      %493 = vmatprep.subr.bf16.mxu0 0
      %494 = vmatpush1.bf16.msra.mxu0 0
      %495 = vmatprep.subr.bf16.mxu0 0
      %496 = vmatpush1.bf16.msra.mxu0 0
      %497 = vmatprep.subr.bf16.mxu0 0
      %498 = vmatpush1.bf16.msra.mxu0 0
      %499 = vmatprep.subr.bf16.mxu0 0
      %500 = vmatpush1.bf16.msra.mxu0 0
      %501 = vmatprep.subr.bf16.mxu0 0
      %502 = vmatpush1.bf16.msra.mxu0 0
      %503 = vmatprep.subr.bf16.mxu0 0
      %504 = vmatpush1.bf16.msra.mxu0 0
      %505 = vmatprep.subr.bf16.mxu0 0
      %506 = vmatpush1.bf16.msra.mxu0 0
      %507 = vmatprep.subr.bf16.mxu0 %v488
      %508 = vmatpush1.bf16.msra.mxu0 %v485
      %509 = vmatprep.subr.bf16.mxu0 0
      %510 = vmatpush2.bf16.msra.mxu0 0
      %511 = vmatprep.subr.bf16.mxu0 0
      %512 = vmatpush2.bf16.msra.mxu0 0
      %513 = vmatprep.subr.bf16.mxu0 0
      %514 = vmatpush2.bf16.msra.mxu0 0
      %515 = vmatprep.subr.bf16.mxu0 0
      %516 = vmatpush2.bf16.msra.mxu0 0
      %517 = vmatprep.subr.bf16.mxu0 0
      %518 = vmatpush2.bf16.msra.mxu0 0
      %519 = vmatprep.subr.bf16.mxu0 0
      %520 = vmatpush2.bf16.msra.mxu0 0
      %521 = vmatprep.subr.bf16.mxu0 0
      %522 = vmatpush2.bf16.msra.mxu0 0
      %523 = vmatprep.subr.bf16.mxu0 0
      %524 = vmatpush2.bf16.msra.mxu0 0
      %525 = vmatprep.mubr.bf16.mxu0 0
      %526 = vmatmul.mubr.bf16.gmra.mxu0 %v482
      %v527 = vpop.f32.mrf.mxu0
      %v528 = vadd.f32 0.0, %v527
      %v529 = vpop.f32.mrf.mxu0
      %v530 = vadd.f32 0.0, %v529
      %v531 = vpop.f32.mrf.mxu0
      %v532 = vpop.f32.mrf.mxu0
      %533 = vdwg.mxu0
      %534 = vmatprep.subr.bf16.mxu0 0
      %535 = vmatpush1.bf16.msra.mxu0 0
      %536 = vmatprep.subr.bf16.mxu0 0
      %537 = vmatpush1.bf16.msra.mxu0 0
      %538 = vmatprep.subr.bf16.mxu0 0
      %539 = vmatpush1.bf16.msra.mxu0 0
      %540 = vmatprep.subr.bf16.mxu0 0
      %541 = vmatpush1.bf16.msra.mxu0 0
      %542 = vmatprep.subr.bf16.mxu0 0
      %543 = vmatpush1.bf16.msra.mxu0 0
      %544 = vmatprep.subr.bf16.mxu0 0
      %545 = vmatpush1.bf16.msra.mxu0 0
      %546 = vmatprep.subr.bf16.mxu0 0
      %547 = vmatpush1.bf16.msra.mxu0 0
      %548 = vmatprep.subr.bf16.mxu0 0
      %549 = vmatpush1.bf16.msra.mxu0 %v491
      %550 = vmatprep.subr.bf16.mxu0 0
      %551 = vmatpush2.bf16.msra.mxu0 0
      %552 = vmatprep.subr.bf16.mxu0 0
      %553 = vmatpush2.bf16.msra.mxu0 0
      %554 = vmatprep.subr.bf16.mxu0 0
      %555 = vmatpush2.bf16.msra.mxu0 0
      %556 = vmatprep.subr.bf16.mxu0 0
      %557 = vmatpush2.bf16.msra.mxu0 0
      %558 = vmatprep.subr.bf16.mxu0 0
      %559 = vmatpush2.bf16.msra.mxu0 0
      %560 = vmatprep.subr.bf16.mxu0 0
      %561 = vmatpush2.bf16.msra.mxu0 0
      %562 = vmatprep.subr.bf16.mxu0 0
      %563 = vmatpush2.bf16.msra.mxu0 0
      %564 = vmatprep.subr.bf16.mxu0 0
      %565 = vmatpush2.bf16.msra.mxu0 0
      %566 = vmatprep.mubr.bf16.mxu0 0
      %567 = vmatmul.mubr.bf16.gmra.mxu0 %v482
      %v568 = vpop.f32.mrf.mxu0
      %v569 = vadd.f32 0.0, %v568
      %v570 = vpop.f32.mrf.mxu0
      %v571 = vpop.f32.mrf.mxu0
      %v572 = vpop.f32.mrf.mxu0
      %573 = vdwg.mxu0
      %v574 = vadd.f32 %v402, %v528
      %v575 = vadd.f32 %v404, %v530
      %v576 = vadd.f32 %v443, %v569
      %v577 = vld [vmem:[%s198] sm:$0xff]
      %s578 = scalar_lea.vmem %s1, 12
      %v579 = vld [vmem:[%s578] sm:$0xf]
      %v581 = vcombine.high %v577, %v577
      %v583 = vunpack.c.l.s4 1983009808
      %v584 = vunpack.c.0.s8 %v583
      %v585 = vlaneseq
      %v586 = vshrl.u32 %v585, 7
      %v587 = vsub.s32 %v584, %v586
      %v588 = vrot.slane %v577, %v587
      %v590 = vunpack.c.l.s4 1983009808
      %v591 = vunpack.c.0.s8 %v590
      %v592 = vlaneseq
      %v593 = vshrl.u32 %v592, 7
      %v594 = vsub.s32 %v591, %v593
      %v595 = vrot.slane %v581, %v594
      %v596 = vcombine.high %v588, %v588
      %v597 = vcombine.high %v595, %v595
      %598 = vrot.lane.b32.xlu0 %v588, 110
      %v599 = vpop.permute.xlu0 %598
      %600 = vrot.lane.b32.xlu0 %v596, 110
      %v601 = vpop.permute.xlu0 %600
      %602 = vrot.lane.b32.xlu0 %v595, 110
      %v603 = vpop.permute.xlu0 %602
      %604 = vrot.lane.b32.xlu0 %v597, 110
      %v605 = vpop.permute.xlu0 %604
      %vm606 = vcmask 900096
      %v607 = vsel %vm606, %v599, %v601
      %v608 = vsel %vm606, %v601, %v603
      %v609 = vsel %vm606, %v603, %v605
      %v611 = vsel %vm243, %v579, 0
      %v614 = vsel %vm247, %v607, 0
      %v617 = vsel %vm247, %v608, 0
      %v620 = vsel %vm247, %v609, 0
      %622 = vmatprep.subr.bf16.mxu0 0
      %623 = vmatpush1.bf16.msra.mxu0 0
      %624 = vmatprep.subr.bf16.mxu0 0
      %625 = vmatpush1.bf16.msra.mxu0 0
      %626 = vmatprep.subr.bf16.mxu0 0
      %627 = vmatpush1.bf16.msra.mxu0 0
      %628 = vmatprep.subr.bf16.mxu0 0
      %629 = vmatpush1.bf16.msra.mxu0 0
      %630 = vmatprep.subr.bf16.mxu0 0
      %631 = vmatpush1.bf16.msra.mxu0 0
      %632 = vmatprep.subr.bf16.mxu0 0
      %633 = vmatpush1.bf16.msra.mxu0 0
      %634 = vmatprep.subr.bf16.mxu0 0
      %635 = vmatpush1.bf16.msra.mxu0 0
      %636 = vmatprep.subr.bf16.mxu0 %v617
      %637 = vmatpush1.bf16.msra.mxu0 %v614
      %638 = vmatprep.subr.bf16.mxu0 0
      %639 = vmatpush2.bf16.msra.mxu0 0
      %640 = vmatprep.subr.bf16.mxu0 0
      %641 = vmatpush2.bf16.msra.mxu0 0
      %642 = vmatprep.subr.bf16.mxu0 0
      %643 = vmatpush2.bf16.msra.mxu0 0
      %644 = vmatprep.subr.bf16.mxu0 0
      %645 = vmatpush2.bf16.msra.mxu0 0
      %646 = vmatprep.subr.bf16.mxu0 0
      %647 = vmatpush2.bf16.msra.mxu0 0
      %648 = vmatprep.subr.bf16.mxu0 0
      %649 = vmatpush2.bf16.msra.mxu0 0
      %650 = vmatprep.subr.bf16.mxu0 0
      %651 = vmatpush2.bf16.msra.mxu0 0
      %652 = vmatprep.subr.bf16.mxu0 0
      %653 = vmatpush2.bf16.msra.mxu0 0
      %654 = vmatprep.mubr.bf16.mxu0 0
      %655 = vmatmul.mubr.bf16.gmra.mxu0 %v611
      %v656 = vpop.f32.mrf.mxu0
      %v657 = vadd.f32 0.0, %v656
      %v658 = vpop.f32.mrf.mxu0
      %v659 = vadd.f32 0.0, %v658
      %v660 = vpop.f32.mrf.mxu0
      %v661 = vpop.f32.mrf.mxu0
      %662 = vdwg.mxu0
      %663 = vmatprep.subr.bf16.mxu0 0
      %664 = vmatpush1.bf16.msra.mxu0 0
      %665 = vmatprep.subr.bf16.mxu0 0
      %666 = vmatpush1.bf16.msra.mxu0 0
      %667 = vmatprep.subr.bf16.mxu0 0
      %668 = vmatpush1.bf16.msra.mxu0 0
      %669 = vmatprep.subr.bf16.mxu0 0
      %670 = vmatpush1.bf16.msra.mxu0 0
      %671 = vmatprep.subr.bf16.mxu0 0
      %672 = vmatpush1.bf16.msra.mxu0 0
      %673 = vmatprep.subr.bf16.mxu0 0
      %674 = vmatpush1.bf16.msra.mxu0 0
      %675 = vmatprep.subr.bf16.mxu0 0
      %676 = vmatpush1.bf16.msra.mxu0 0
      %677 = vmatprep.subr.bf16.mxu0 0
      %678 = vmatpush1.bf16.msra.mxu0 %v620
      %679 = vmatprep.subr.bf16.mxu0 0
      %680 = vmatpush2.bf16.msra.mxu0 0
      %681 = vmatprep.subr.bf16.mxu0 0
      %682 = vmatpush2.bf16.msra.mxu0 0
      %683 = vmatprep.subr.bf16.mxu0 0
      %684 = vmatpush2.bf16.msra.mxu0 0
      %685 = vmatprep.subr.bf16.mxu0 0
      %686 = vmatpush2.bf16.msra.mxu0 0
      %687 = vmatprep.subr.bf16.mxu0 0
      %688 = vmatpush2.bf16.msra.mxu0 0
      %689 = vmatprep.subr.bf16.mxu0 0
      %690 = vmatpush2.bf16.msra.mxu0 0
      %691 = vmatprep.subr.bf16.mxu0 0
      %692 = vmatpush2.bf16.msra.mxu0 0
      %693 = vmatprep.subr.bf16.mxu0 0
      %694 = vmatpush2.bf16.msra.mxu0 0
      %695 = vmatprep.mubr.bf16.mxu0 0
      %696 = vmatmul.mubr.bf16.gmra.mxu0 %v611
      %v697 = vpop.f32.mrf.mxu0
      %v698 = vadd.f32 0.0, %v697
      %v699 = vpop.f32.mrf.mxu0
      %v700 = vpop.f32.mrf.mxu0
      %v701 = vpop.f32.mrf.mxu0
      %702 = vdwg.mxu0
      %v703 = vadd.f32 %v574, %v657
      %v704 = vadd.f32 %v575, %v659
      %v705 = vadd.f32 %v576, %v698
      %v706 = vld [vmem:[%s198] sm:$0xff]
      %s707 = scalar_lea.vmem %s1, 16
      %v708 = vld [vmem:[%s707] sm:$0xf]
      %v710 = vcombine.high %v706, %v706
      %v712 = vunpack.c.l.s4 1983009808
      %v713 = vunpack.c.0.s8 %v712
      %v714 = vlaneseq
      %v715 = vshrl.u32 %v714, 7
      %v716 = vsub.s32 %v713, %v715
      %v717 = vrot.slane %v706, %v716
      %v719 = vunpack.c.l.s4 1983009808
      %v720 = vunpack.c.0.s8 %v719
      %v721 = vlaneseq
      %v722 = vshrl.u32 %v721, 7
      %v723 = vsub.s32 %v720, %v722
      %v724 = vrot.slane %v710, %v723
      %v725 = vcombine.high %v717, %v717
      %v726 = vcombine.high %v724, %v724
      %727 = vrot.lane.b32.xlu0 %v717, 109
      %v728 = vpop.permute.xlu0 %727
      %729 = vrot.lane.b32.xlu0 %v725, 109
      %v730 = vpop.permute.xlu0 %729
      %731 = vrot.lane.b32.xlu0 %v724, 109
      %v732 = vpop.permute.xlu0 %731
      %733 = vrot.lane.b32.xlu0 %v726, 109
      %v734 = vpop.permute.xlu0 %733
      %vm735 = vcmask 891904
      %v736 = vsel %vm735, %v728, %v730
      %v737 = vsel %vm735, %v730, %v732
      %v738 = vsel %vm735, %v732, %v734
      %v740 = vsel %vm243, %v708, 0
      %v743 = vsel %vm247, %v736, 0
      %v746 = vsel %vm247, %v737, 0
      %v749 = vsel %vm247, %v738, 0
      %751 = vmatprep.subr.bf16.mxu0 0
      %752 = vmatpush1.bf16.msra.mxu0 0
      %753 = vmatprep.subr.bf16.mxu0 0
      %754 = vmatpush1.bf16.msra.mxu0 0
      %755 = vmatprep.subr.bf16.mxu0 0
      %756 = vmatpush1.bf16.msra.mxu0 0
      %757 = vmatprep.subr.bf16.mxu0 0
      %758 = vmatpush1.bf16.msra.mxu0 0
      %759 = vmatprep.subr.bf16.mxu0 0
      %760 = vmatpush1.bf16.msra.mxu0 0
      %761 = vmatprep.subr.bf16.mxu0 0
      %762 = vmatpush1.bf16.msra.mxu0 0
      %763 = vmatprep.subr.bf16.mxu0 0
      %764 = vmatpush1.bf16.msra.mxu0 0
      %765 = vmatprep.subr.bf16.mxu0 %v746
      %766 = vmatpush1.bf16.msra.mxu0 %v743
      %767 = vmatprep.subr.bf16.mxu0 0
      %768 = vmatpush2.bf16.msra.mxu0 0
      %769 = vmatprep.subr.bf16.mxu0 0
      %770 = vmatpush2.bf16.msra.mxu0 0
      %771 = vmatprep.subr.bf16.mxu0 0
      %772 = vmatpush2.bf16.msra.mxu0 0
      %773 = vmatprep.subr.bf16.mxu0 0
      %774 = vmatpush2.bf16.msra.mxu0 0
      %775 = vmatprep.subr.bf16.mxu0 0
      %776 = vmatpush2.bf16.msra.mxu0 0
      %777 = vmatprep.subr.bf16.mxu0 0
      %778 = vmatpush2.bf16.msra.mxu0 0
      %779 = vmatprep.subr.bf16.mxu0 0
      %780 = vmatpush2.bf16.msra.mxu0 0
      %781 = vmatprep.subr.bf16.mxu0 0
      %782 = vmatpush2.bf16.msra.mxu0 0
      %783 = vmatprep.mubr.bf16.mxu0 0
      %784 = vmatmul.mubr.bf16.gmra.mxu0 %v740
      %v785 = vpop.f32.mrf.mxu0
      %v786 = vadd.f32 0.0, %v785
      %v787 = vpop.f32.mrf.mxu0
      %v788 = vadd.f32 0.0, %v787
      %v789 = vpop.f32.mrf.mxu0
      %v790 = vpop.f32.mrf.mxu0
      %791 = vdwg.mxu0
      %792 = vmatprep.subr.bf16.mxu0 0
      %793 = vmatpush1.bf16.msra.mxu0 0
      %794 = vmatprep.subr.bf16.mxu0 0
      %795 = vmatpush1.bf16.msra.mxu0 0
      %796 = vmatprep.subr.bf16.mxu0 0
      %797 = vmatpush1.bf16.msra.mxu0 0
      %798 = vmatprep.subr.bf16.mxu0 0
      %799 = vmatpush1.bf16.msra.mxu0 0
      %800 = vmatprep.subr.bf16.mxu0 0
      %801 = vmatpush1.bf16.msra.mxu0 0
      %802 = vmatprep.subr.bf16.mxu0 0
      %803 = vmatpush1.bf16.msra.mxu0 0
      %804 = vmatprep.subr.bf16.mxu0 0
      %805 = vmatpush1.bf16.msra.mxu0 0
      %806 = vmatprep.subr.bf16.mxu0 0
      %807 = vmatpush1.bf16.msra.mxu0 %v749
      %808 = vmatprep.subr.bf16.mxu0 0
      %809 = vmatpush2.bf16.msra.mxu0 0
      %810 = vmatprep.subr.bf16.mxu0 0
      %811 = vmatpush2.bf16.msra.mxu0 0
      %812 = vmatprep.subr.bf16.mxu0 0
      %813 = vmatpush2.bf16.msra.mxu0 0
      %814 = vmatprep.subr.bf16.mxu0 0
      %815 = vmatpush2.bf16.msra.mxu0 0
      %816 = vmatprep.subr.bf16.mxu0 0
      %817 = vmatpush2.bf16.msra.mxu0 0
      %818 = vmatprep.subr.bf16.mxu0 0
      %819 = vmatpush2.bf16.msra.mxu0 0
      %820 = vmatprep.subr.bf16.mxu0 0
      %821 = vmatpush2.bf16.msra.mxu0 0
      %822 = vmatprep.subr.bf16.mxu0 0
      %823 = vmatpush2.bf16.msra.mxu0 0
      %824 = vmatprep.mubr.bf16.mxu0 0
      %825 = vmatmul.mubr.bf16.gmra.mxu0 %v740
      %v826 = vpop.f32.mrf.mxu0
      %v827 = vadd.f32 0.0, %v826
      %v828 = vpop.f32.mrf.mxu0
      %v829 = vpop.f32.mrf.mxu0
      %v830 = vpop.f32.mrf.mxu0
      %831 = vdwg.mxu0
      %v832 = vadd.f32 %v703, %v786
      %v833 = vadd.f32 %v704, %v788
      %v834 = vadd.f32 %v705, %v827
      %v835 = vld [vmem:[%s198] sm:$0xff]
      %s836 = scalar_lea.vmem %s1, 20
      %v837 = vld [vmem:[%s836] sm:$0xf]
      %v839 = vcombine.high %v835, %v835
      %v841 = vunpack.c.l.s4 1983009808
      %v842 = vunpack.c.0.s8 %v841
      %v843 = vlaneseq
      %v844 = vshrl.u32 %v843, 7
      %v845 = vsub.s32 %v842, %v844
      %v846 = vrot.slane %v835, %v845
      %v848 = vunpack.c.l.s4 1983009808
      %v849 = vunpack.c.0.s8 %v848
      %v850 = vlaneseq
      %v851 = vshrl.u32 %v850, 7
      %v852 = vsub.s32 %v849, %v851
      %v853 = vrot.slane %v839, %v852
      %v854 = vcombine.high %v846, %v846
      %v855 = vcombine.high %v853, %v853
      %856 = vrot.lane.b32.xlu0 %v846, 108
      %v857 = vpop.permute.xlu0 %856
      %858 = vrot.lane.b32.xlu0 %v854, 108
      %v859 = vpop.permute.xlu0 %858
      %860 = vrot.lane.b32.xlu0 %v853, 108
      %v861 = vpop.permute.xlu0 %860
      %862 = vrot.lane.b32.xlu0 %v855, 108
      %v863 = vpop.permute.xlu0 %862
      %vm864 = vcmask 883712
      %v865 = vsel %vm864, %v857, %v859
      %v866 = vsel %vm864, %v859, %v861
      %v867 = vsel %vm864, %v861, %v863
      %v869 = vsel %vm243, %v837, 0
      %v872 = vsel %vm247, %v865, 0
      %v875 = vsel %vm247, %v866, 0
      %v878 = vsel %vm247, %v867, 0
      %880 = vmatprep.subr.bf16.mxu0 0
      %881 = vmatpush1.bf16.msra.mxu0 0
      %882 = vmatprep.subr.bf16.mxu0 0
      %883 = vmatpush1.bf16.msra.mxu0 0
      %884 = vmatprep.subr.bf16.mxu0 0
      %885 = vmatpush1.bf16.msra.mxu0 0
      %886 = vmatprep.subr.bf16.mxu0 0
      %887 = vmatpush1.bf16.msra.mxu0 0
      %888 = vmatprep.subr.bf16.mxu0 0
      %889 = vmatpush1.bf16.msra.mxu0 0
      %890 = vmatprep.subr.bf16.mxu0 0
      %891 = vmatpush1.bf16.msra.mxu0 0
      %892 = vmatprep.subr.bf16.mxu0 0
      %893 = vmatpush1.bf16.msra.mxu0 0
      %894 = vmatprep.subr.bf16.mxu0 %v875
      %895 = vmatpush1.bf16.msra.mxu0 %v872
      %896 = vmatprep.subr.bf16.mxu0 0
      %897 = vmatpush2.bf16.msra.mxu0 0
      %898 = vmatprep.subr.bf16.mxu0 0
      %899 = vmatpush2.bf16.msra.mxu0 0
      %900 = vmatprep.subr.bf16.mxu0 0
      %901 = vmatpush2.bf16.msra.mxu0 0
      %902 = vmatprep.subr.bf16.mxu0 0
      %903 = vmatpush2.bf16.msra.mxu0 0
      %904 = vmatprep.subr.bf16.mxu0 0
      %905 = vmatpush2.bf16.msra.mxu0 0
      %906 = vmatprep.subr.bf16.mxu0 0
      %907 = vmatpush2.bf16.msra.mxu0 0
      %908 = vmatprep.subr.bf16.mxu0 0
      %909 = vmatpush2.bf16.msra.mxu0 0
      %910 = vmatprep.subr.bf16.mxu0 0
      %911 = vmatpush2.bf16.msra.mxu0 0
      %912 = vmatprep.mubr.bf16.mxu0 0
      %913 = vmatmul.mubr.bf16.gmra.mxu0 %v869
      %v914 = vpop.f32.mrf.mxu0
      %v915 = vadd.f32 0.0, %v914
      %v916 = vpop.f32.mrf.mxu0
      %v917 = vadd.f32 0.0, %v916
      %v918 = vpop.f32.mrf.mxu0
      %v919 = vpop.f32.mrf.mxu0
      %920 = vdwg.mxu0
      %921 = vmatprep.subr.bf16.mxu0 0
      %922 = vmatpush1.bf16.msra.mxu0 0
      %923 = vmatprep.subr.bf16.mxu0 0
      %924 = vmatpush1.bf16.msra.mxu0 0
      %925 = vmatprep.subr.bf16.mxu0 0
      %926 = vmatpush1.bf16.msra.mxu0 0
      %927 = vmatprep.subr.bf16.mxu0 0
      %928 = vmatpush1.bf16.msra.mxu0 0
      %929 = vmatprep.subr.bf16.mxu0 0
      %930 = vmatpush1.bf16.msra.mxu0 0
      %931 = vmatprep.subr.bf16.mxu0 0
      %932 = vmatpush1.bf16.msra.mxu0 0
      %933 = vmatprep.subr.bf16.mxu0 0
      %934 = vmatpush1.bf16.msra.mxu0 0
      %935 = vmatprep.subr.bf16.mxu0 0
      %936 = vmatpush1.bf16.msra.mxu0 %v878
      %937 = vmatprep.subr.bf16.mxu0 0
      %938 = vmatpush2.bf16.msra.mxu0 0
      %939 = vmatprep.subr.bf16.mxu0 0
      %940 = vmatpush2.bf16.msra.mxu0 0
      %941 = vmatprep.subr.bf16.mxu0 0
      %942 = vmatpush2.bf16.msra.mxu0 0
      %943 = vmatprep.subr.bf16.mxu0 0
      %944 = vmatpush2.bf16.msra.mxu0 0
      %945 = vmatprep.subr.bf16.mxu0 0
      %946 = vmatpush2.bf16.msra.mxu0 0
      %947 = vmatprep.subr.bf16.mxu0 0
      %948 = vmatpush2.bf16.msra.mxu0 0
      %949 = vmatprep.subr.bf16.mxu0 0
      %950 = vmatpush2.bf16.msra.mxu0 0
      %951 = vmatprep.subr.bf16.mxu0 0
      %952 = vmatpush2.bf16.msra.mxu0 0
      %953 = vmatprep.mubr.bf16.mxu0 0
      %954 = vmatmul.mubr.bf16.gmra.mxu0 %v869
      %v955 = vpop.f32.mrf.mxu0
      %v956 = vadd.f32 0.0, %v955
      %v957 = vpop.f32.mrf.mxu0
      %v958 = vpop.f32.mrf.mxu0
      %v959 = vpop.f32.mrf.mxu0
      %960 = vdwg.mxu0
      %v961 = vadd.f32 %v832, %v915
      %v962 = vadd.f32 %v833, %v917
      %v963 = vadd.f32 %v834, %v956
      %v964 = vld [vmem:[%s198] sm:$0xff]
      %s965 = scalar_lea.vmem %s1, 24
      %v966 = vld [vmem:[%s965] sm:$0xf]
      %v968 = vcombine.high %v964, %v964
      %v970 = vunpack.c.l.s4 1983009808
      %v971 = vunpack.c.0.s8 %v970
      %v972 = vlaneseq
      %v973 = vshrl.u32 %v972, 7
      %v974 = vsub.s32 %v971, %v973
      %v975 = vrot.slane %v964, %v974
      %v977 = vunpack.c.l.s4 1983009808
      %v978 = vunpack.c.0.s8 %v977
      %v979 = vlaneseq
      %v980 = vshrl.u32 %v979, 7
      %v981 = vsub.s32 %v978, %v980
      %v982 = vrot.slane %v968, %v981
      %v983 = vcombine.high %v975, %v975
      %v984 = vcombine.high %v982, %v982
      %985 = vrot.lane.b32.xlu0 %v975, 92
      %v986 = vpop.permute.xlu0 %985
      %987 = vrot.lane.b32.xlu0 %v983, 92
      %v988 = vpop.permute.xlu0 %987
      %989 = vrot.lane.b32.xlu0 %v982, 92
      %v990 = vpop.permute.xlu0 %989
      %991 = vrot.lane.b32.xlu0 %v984, 92
      %v992 = vpop.permute.xlu0 %991
      %vm993 = vcmask 752640
      %v994 = vsel %vm993, %v986, %v988
      %v995 = vsel %vm993, %v988, %v990
      %v996 = vsel %vm993, %v990, %v992
      %v998 = vsel %vm243, %v966, 0
      %v1001 = vsel %vm247, %v994, 0
      %v1004 = vsel %vm247, %v995, 0
      %v1007 = vsel %vm247, %v996, 0
      %1009 = vmatprep.subr.bf16.mxu0 0
      %1010 = vmatpush1.bf16.msra.mxu0 0
      %1011 = vmatprep.subr.bf16.mxu0 0
      %1012 = vmatpush1.bf16.msra.mxu0 0
      %1013 = vmatprep.subr.bf16.mxu0 0
      %1014 = vmatpush1.bf16.msra.mxu0 0
      %1015 = vmatprep.subr.bf16.mxu0 0
      %1016 = vmatpush1.bf16.msra.mxu0 0
      %1017 = vmatprep.subr.bf16.mxu0 0
      %1018 = vmatpush1.bf16.msra.mxu0 0
      %1019 = vmatprep.subr.bf16.mxu0 0
      %1020 = vmatpush1.bf16.msra.mxu0 0
      %1021 = vmatprep.subr.bf16.mxu0 0
      %1022 = vmatpush1.bf16.msra.mxu0 0
      %1023 = vmatprep.subr.bf16.mxu0 %v1004
      %1024 = vmatpush1.bf16.msra.mxu0 %v1001
      %1025 = vmatprep.subr.bf16.mxu0 0
      %1026 = vmatpush2.bf16.msra.mxu0 0
      %1027 = vmatprep.subr.bf16.mxu0 0
      %1028 = vmatpush2.bf16.msra.mxu0 0
      %1029 = vmatprep.subr.bf16.mxu0 0
      %1030 = vmatpush2.bf16.msra.mxu0 0
      %1031 = vmatprep.subr.bf16.mxu0 0
      %1032 = vmatpush2.bf16.msra.mxu0 0
      %1033 = vmatprep.subr.bf16.mxu0 0
      %1034 = vmatpush2.bf16.msra.mxu0 0
      %1035 = vmatprep.subr.bf16.mxu0 0
      %1036 = vmatpush2.bf16.msra.mxu0 0
      %1037 = vmatprep.subr.bf16.mxu0 0
      %1038 = vmatpush2.bf16.msra.mxu0 0
      %1039 = vmatprep.subr.bf16.mxu0 0
      %1040 = vmatpush2.bf16.msra.mxu0 0
      %1041 = vmatprep.mubr.bf16.mxu0 0
      %1042 = vmatmul.mubr.bf16.gmra.mxu0 %v998
      %v1043 = vpop.f32.mrf.mxu0
      %v1044 = vadd.f32 0.0, %v1043
      %v1045 = vpop.f32.mrf.mxu0
      %v1046 = vadd.f32 0.0, %v1045
      %v1047 = vpop.f32.mrf.mxu0
      %v1048 = vpop.f32.mrf.mxu0
      %1049 = vdwg.mxu0
      %1050 = vmatprep.subr.bf16.mxu0 0
      %1051 = vmatpush1.bf16.msra.mxu0 0
      %1052 = vmatprep.subr.bf16.mxu0 0
      %1053 = vmatpush1.bf16.msra.mxu0 0
      %1054 = vmatprep.subr.bf16.mxu0 0
      %1055 = vmatpush1.bf16.msra.mxu0 0
      %1056 = vmatprep.subr.bf16.mxu0 0
      %1057 = vmatpush1.bf16.msra.mxu0 0
      %1058 = vmatprep.subr.bf16.mxu0 0
      %1059 = vmatpush1.bf16.msra.mxu0 0
      %1060 = vmatprep.subr.bf16.mxu0 0
      %1061 = vmatpush1.bf16.msra.mxu0 0
      %1062 = vmatprep.subr.bf16.mxu0 0
      %1063 = vmatpush1.bf16.msra.mxu0 0
      %1064 = vmatprep.subr.bf16.mxu0 0
      %1065 = vmatpush1.bf16.msra.mxu0 %v1007
      %1066 = vmatprep.subr.bf16.mxu0 0
      %1067 = vmatpush2.bf16.msra.mxu0 0
      %1068 = vmatprep.subr.bf16.mxu0 0
      %1069 = vmatpush2.bf16.msra.mxu0 0
      %1070 = vmatprep.subr.bf16.mxu0 0
      %1071 = vmatpush2.bf16.msra.mxu0 0
      %1072 = vmatprep.subr.bf16.mxu0 0
      %1073 = vmatpush2.bf16.msra.mxu0 0
      %1074 = vmatprep.subr.bf16.mxu0 0
      %1075 = vmatpush2.bf16.msra.mxu0 0
      %1076 = vmatprep.subr.bf16.mxu0 0
      %1077 = vmatpush2.bf16.msra.mxu0 0
      %1078 = vmatprep.subr.bf16.mxu0 0
      %1079 = vmatpush2.bf16.msra.mxu0 0
      %1080 = vmatprep.subr.bf16.mxu0 0
      %1081 = vmatpush2.bf16.msra.mxu0 0
      %1082 = vmatprep.mubr.bf16.mxu0 0
      %1083 = vmatmul.mubr.bf16.gmra.mxu0 %v998
      %v1084 = vpop.f32.mrf.mxu0
      %v1085 = vadd.f32 0.0, %v1084
      %v1086 = vpop.f32.mrf.mxu0
      %v1087 = vpop.f32.mrf.mxu0
      %v1088 = vpop.f32.mrf.mxu0
      %1089 = vdwg.mxu0
      %v1090 = vadd.f32 %v961, %v1044
      %v1091 = vadd.f32 %v962, %v1046
      %v1092 = vadd.f32 %v963, %v1085
      %v1093 = vld [vmem:[%s198] sm:$0xff]
      %s1094 = scalar_lea.vmem %s1, 28
      %v1095 = vld [vmem:[%s1094] sm:$0xf]
      %v1097 = vcombine.high %v1093, %v1093
      %v1099 = vunpack.c.l.s4 1983009808
      %v1100 = vunpack.c.0.s8 %v1099
      %v1101 = vlaneseq
      %v1102 = vshrl.u32 %v1101, 7
      %v1103 = vsub.s32 %v1100, %v1102
      %v1104 = vrot.slane %v1093, %v1103
      %v1106 = vunpack.c.l.s4 1983009808
      %v1107 = vunpack.c.0.s8 %v1106
      %v1108 = vlaneseq
      %v1109 = vshrl.u32 %v1108, 7
      %v1110 = vsub.s32 %v1107, %v1109
      %v1111 = vrot.slane %v1097, %v1110
      %v1112 = vcombine.high %v1104, %v1104
      %v1113 = vcombine.high %v1111, %v1111
      %1114 = vrot.lane.b32.xlu0 %v1104, 91
      %v1115 = vpop.permute.xlu0 %1114
      %1116 = vrot.lane.b32.xlu0 %v1112, 91
      %v1117 = vpop.permute.xlu0 %1116
      %1118 = vrot.lane.b32.xlu0 %v1111, 91
      %v1119 = vpop.permute.xlu0 %1118
      %1120 = vrot.lane.b32.xlu0 %v1113, 91
      %v1121 = vpop.permute.xlu0 %1120
      %vm1122 = vcmask 744448
      %v1123 = vsel %vm1122, %v1115, %v1117
      %v1124 = vsel %vm1122, %v1117, %v1119
      %v1125 = vsel %vm1122, %v1119, %v1121
      %v1127 = vsel %vm243, %v1095, 0
      %v1130 = vsel %vm247, %v1123, 0
      %v1133 = vsel %vm247, %v1124, 0
      %v1136 = vsel %vm247, %v1125, 0
      %1138 = vmatprep.subr.bf16.mxu0 0
      %1139 = vmatpush1.bf16.msra.mxu0 0
      %1140 = vmatprep.subr.bf16.mxu0 0
      %1141 = vmatpush1.bf16.msra.mxu0 0
      %1142 = vmatprep.subr.bf16.mxu0 0
      %1143 = vmatpush1.bf16.msra.mxu0 0
      %1144 = vmatprep.subr.bf16.mxu0 0
      %1145 = vmatpush1.bf16.msra.mxu0 0
      %1146 = vmatprep.subr.bf16.mxu0 0
      %1147 = vmatpush1.bf16.msra.mxu0 0
      %1148 = vmatprep.subr.bf16.mxu0 0
      %1149 = vmatpush1.bf16.msra.mxu0 0
      %1150 = vmatprep.subr.bf16.mxu0 0
      %1151 = vmatpush1.bf16.msra.mxu0 0
      %1152 = vmatprep.subr.bf16.mxu0 %v1133
      %1153 = vmatpush1.bf16.msra.mxu0 %v1130
      %1154 = vmatprep.subr.bf16.mxu0 0
      %1155 = vmatpush2.bf16.msra.mxu0 0
      %1156 = vmatprep.subr.bf16.mxu0 0
      %1157 = vmatpush2.bf16.msra.mxu0 0
      %1158 = vmatprep.subr.bf16.mxu0 0
      %1159 = vmatpush2.bf16.msra.mxu0 0
      %1160 = vmatprep.subr.bf16.mxu0 0
      %1161 = vmatpush2.bf16.msra.mxu0 0
      %1162 = vmatprep.subr.bf16.mxu0 0
      %1163 = vmatpush2.bf16.msra.mxu0 0
      %1164 = vmatprep.subr.bf16.mxu0 0
      %1165 = vmatpush2.bf16.msra.mxu0 0
      %1166 = vmatprep.subr.bf16.mxu0 0
      %1167 = vmatpush2.bf16.msra.mxu0 0
      %1168 = vmatprep.subr.bf16.mxu0 0
      %1169 = vmatpush2.bf16.msra.mxu0 0
      %1170 = vmatprep.mubr.bf16.mxu0 0
      %1171 = vmatmul.mubr.bf16.gmra.mxu0 %v1127
      %v1172 = vpop.f32.mrf.mxu0
      %v1173 = vadd.f32 0.0, %v1172
      %v1174 = vpop.f32.mrf.mxu0
      %v1175 = vadd.f32 0.0, %v1174
      %v1176 = vpop.f32.mrf.mxu0
      %v1177 = vpop.f32.mrf.mxu0
      %1178 = vdwg.mxu0
      %1179 = vmatprep.subr.bf16.mxu0 0
      %1180 = vmatpush1.bf16.msra.mxu0 0
      %1181 = vmatprep.subr.bf16.mxu0 0
      %1182 = vmatpush1.bf16.msra.mxu0 0
      %1183 = vmatprep.subr.bf16.mxu0 0
      %1184 = vmatpush1.bf16.msra.mxu0 0
      %1185 = vmatprep.subr.bf16.mxu0 0
      %1186 = vmatpush1.bf16.msra.mxu0 0
      %1187 = vmatprep.subr.bf16.mxu0 0
      %1188 = vmatpush1.bf16.msra.mxu0 0
      %1189 = vmatprep.subr.bf16.mxu0 0
      %1190 = vmatpush1.bf16.msra.mxu0 0
      %1191 = vmatprep.subr.bf16.mxu0 0
      %1192 = vmatpush1.bf16.msra.mxu0 0
      %1193 = vmatprep.subr.bf16.mxu0 0
      %1194 = vmatpush1.bf16.msra.mxu0 %v1136
      %1195 = vmatprep.subr.bf16.mxu0 0
      %1196 = vmatpush2.bf16.msra.mxu0 0
      %1197 = vmatprep.subr.bf16.mxu0 0
      %1198 = vmatpush2.bf16.msra.mxu0 0
      %1199 = vmatprep.subr.bf16.mxu0 0
      %1200 = vmatpush2.bf16.msra.mxu0 0
      %1201 = vmatprep.subr.bf16.mxu0 0
      %1202 = vmatpush2.bf16.msra.mxu0 0
      %1203 = vmatprep.subr.bf16.mxu0 0
      %1204 = vmatpush2.bf16.msra.mxu0 0
      %1205 = vmatprep.subr.bf16.mxu0 0
      %1206 = vmatpush2.bf16.msra.mxu0 0
      %1207 = vmatprep.subr.bf16.mxu0 0
      %1208 = vmatpush2.bf16.msra.mxu0 0
      %1209 = vmatprep.subr.bf16.mxu0 0
      %1210 = vmatpush2.bf16.msra.mxu0 0
      %1211 = vmatprep.mubr.bf16.mxu0 0
      %1212 = vmatmul.mubr.bf16.gmra.mxu0 %v1127
      %v1213 = vpop.f32.mrf.mxu0
      %v1214 = vadd.f32 0.0, %v1213
      %v1215 = vpop.f32.mrf.mxu0
      %v1216 = vpop.f32.mrf.mxu0
      %v1217 = vpop.f32.mrf.mxu0
      %1218 = vdwg.mxu0
      %v1219 = vadd.f32 %v1090, %v1173
      %v1220 = vadd.f32 %v1091, %v1175
      %v1221 = vadd.f32 %v1092, %v1214
      %v1222 = vld [vmem:[%s198] sm:$0xff]
      %s1223 = scalar_lea.vmem %s1, 32
      %v1224 = vld [vmem:[%s1223] sm:$0xf]
      %v1226 = vcombine.high %v1222, %v1222
      %v1228 = vunpack.c.l.s4 1983009808
      %v1229 = vunpack.c.0.s8 %v1228
      %v1230 = vlaneseq
      %v1231 = vshrl.u32 %v1230, 7
      %v1232 = vsub.s32 %v1229, %v1231
      %v1233 = vrot.slane %v1222, %v1232
      %v1235 = vunpack.c.l.s4 1983009808
      %v1236 = vunpack.c.0.s8 %v1235
      %v1237 = vlaneseq
      %v1238 = vshrl.u32 %v1237, 7
      %v1239 = vsub.s32 %v1236, %v1238
      %v1240 = vrot.slane %v1226, %v1239
      %v1241 = vcombine.high %v1233, %v1233
      %v1242 = vcombine.high %v1240, %v1240
      %1243 = vrot.lane.b32.xlu0 %v1233, 90
      %v1244 = vpop.permute.xlu0 %1243
      %1245 = vrot.lane.b32.xlu0 %v1241, 90
      %v1246 = vpop.permute.xlu0 %1245
      %1247 = vrot.lane.b32.xlu0 %v1240, 90
      %v1248 = vpop.permute.xlu0 %1247
      %1249 = vrot.lane.b32.xlu0 %v1242, 90
      %v1250 = vpop.permute.xlu0 %1249
      %vm1251 = vcmask 736256
      %v1252 = vsel %vm1251, %v1244, %v1246
      %v1253 = vsel %vm1251, %v1246, %v1248
      %v1254 = vsel %vm1251, %v1248, %v1250
      %v1256 = vsel %vm243, %v1224, 0
      %v1259 = vsel %vm247, %v1252, 0
      %v1262 = vsel %vm247, %v1253, 0
      %v1265 = vsel %vm247, %v1254, 0
      %1267 = vmatprep.subr.bf16.mxu0 0
      %1268 = vmatpush1.bf16.msra.mxu0 0
      %1269 = vmatprep.subr.bf16.mxu0 0
      %1270 = vmatpush1.bf16.msra.mxu0 0
      %1271 = vmatprep.subr.bf16.mxu0 0
      %1272 = vmatpush1.bf16.msra.mxu0 0
      %1273 = vmatprep.subr.bf16.mxu0 0
      %1274 = vmatpush1.bf16.msra.mxu0 0
      %1275 = vmatprep.subr.bf16.mxu0 0
      %1276 = vmatpush1.bf16.msra.mxu0 0
      %1277 = vmatprep.subr.bf16.mxu0 0
      %1278 = vmatpush1.bf16.msra.mxu0 0
      %1279 = vmatprep.subr.bf16.mxu0 0
      %1280 = vmatpush1.bf16.msra.mxu0 0
      %1281 = vmatprep.subr.bf16.mxu0 %v1262
      %1282 = vmatpush1.bf16.msra.mxu0 %v1259
      %1283 = vmatprep.subr.bf16.mxu0 0
      %1284 = vmatpush2.bf16.msra.mxu0 0
      %1285 = vmatprep.subr.bf16.mxu0 0
      %1286 = vmatpush2.bf16.msra.mxu0 0
      %1287 = vmatprep.subr.bf16.mxu0 0
      %1288 = vmatpush2.bf16.msra.mxu0 0
      %1289 = vmatprep.subr.bf16.mxu0 0
      %1290 = vmatpush2.bf16.msra.mxu0 0
      %1291 = vmatprep.subr.bf16.mxu0 0
      %1292 = vmatpush2.bf16.msra.mxu0 0
      %1293 = vmatprep.subr.bf16.mxu0 0
      %1294 = vmatpush2.bf16.msra.mxu0 0
      %1295 = vmatprep.subr.bf16.mxu0 0
      %1296 = vmatpush2.bf16.msra.mxu0 0
      %1297 = vmatprep.subr.bf16.mxu0 0
      %1298 = vmatpush2.bf16.msra.mxu0 0
      %1299 = vmatprep.mubr.bf16.mxu0 0
      %1300 = vmatmul.mubr.bf16.gmra.mxu0 %v1256
      %v1301 = vpop.f32.mrf.mxu0
      %v1302 = vadd.f32 0.0, %v1301
      %v1303 = vpop.f32.mrf.mxu0
      %v1304 = vadd.f32 0.0, %v1303
      %v1305 = vpop.f32.mrf.mxu0
      %v1306 = vpop.f32.mrf.mxu0
      %1307 = vdwg.mxu0
      %1308 = vmatprep.subr.bf16.mxu0 0
      %1309 = vmatpush1.bf16.msra.mxu0 0
      %1310 = vmatprep.subr.bf16.mxu0 0
      %1311 = vmatpush1.bf16.msra.mxu0 0
      %1312 = vmatprep.subr.bf16.mxu0 0
      %1313 = vmatpush1.bf16.msra.mxu0 0
      %1314 = vmatprep.subr.bf16.mxu0 0
      %1315 = vmatpush1.bf16.msra.mxu0 0
      %1316 = vmatprep.subr.bf16.mxu0 0
      %1317 = vmatpush1.bf16.msra.mxu0 0
      %1318 = vmatprep.subr.bf16.mxu0 0
      %1319 = vmatpush1.bf16.msra.mxu0 0
      %1320 = vmatprep.subr.bf16.mxu0 0
      %1321 = vmatpush1.bf16.msra.mxu0 0
      %1322 = vmatprep.subr.bf16.mxu0 0
      %1323 = vmatpush1.bf16.msra.mxu0 %v1265
      %1324 = vmatprep.subr.bf16.mxu0 0
      %1325 = vmatpush2.bf16.msra.mxu0 0
      %1326 = vmatprep.subr.bf16.mxu0 0
      %1327 = vmatpush2.bf16.msra.mxu0 0
      %1328 = vmatprep.subr.bf16.mxu0 0
      %1329 = vmatpush2.bf16.msra.mxu0 0
      %1330 = vmatprep.subr.bf16.mxu0 0
      %1331 = vmatpush2.bf16.msra.mxu0 0
      %1332 = vmatprep.subr.bf16.mxu0 0
      %1333 = vmatpush2.bf16.msra.mxu0 0
      %1334 = vmatprep.subr.bf16.mxu0 0
      %1335 = vmatpush2.bf16.msra.mxu0 0
      %1336 = vmatprep.subr.bf16.mxu0 0
      %1337 = vmatpush2.bf16.msra.mxu0 0
      %1338 = vmatprep.subr.bf16.mxu0 0
      %1339 = vmatpush2.bf16.msra.mxu0 0
      %1340 = vmatprep.mubr.bf16.mxu0 0
      %1341 = vmatmul.mubr.bf16.gmra.mxu0 %v1256
      %v1342 = vpop.f32.mrf.mxu0
      %v1343 = vadd.f32 0.0, %v1342
      %v1344 = vpop.f32.mrf.mxu0
      %v1345 = vpop.f32.mrf.mxu0
      %v1346 = vpop.f32.mrf.mxu0
      %1347 = vdwg.mxu0
      %v1348 = vadd.f32 %v1219, %v1302
      %v1349 = vadd.f32 %v1220, %v1304
      %v1350 = vadd.f32 %v1221, %v1343
      %v1351 = vld [vmem:[%s2] sm:$0x7]
      %v1353 = vlaneseq
      %v1354 = vshrl.u32 %v1353, 7
      %v1355 = vsub.s32 0, %v1354
      %v1356 = vrot.slane %v1351, %v1355
      %v1357 = vlaneseq
      %v1358 = vshrl.u32 %v1357, 7
      %v1359 = vsub.s32 1, %v1358
      %v1360 = vrot.slane %v1351, %v1359
      %v1361 = vlaneseq
      %v1362 = vshrl.u32 %v1361, 7
      %v1363 = vsub.s32 2, %v1362
      %v1364 = vrot.slane %v1351, %v1363
      %v1368 = vmul.f32 %v1348, %v1356
      %v1369 = vmul.f32 %v1349, %v1360
      %v1370 = vmul.f32 %v1350, %v1364
      %v1371 = vadd.f32 %v1368, %v1369
      %v1372 = vadd.f32 %v1371, %v1370
      %1373 = vadd.xlane.f32.xlu0 %v1372
      %v1374 = vpop.xlane.xlu0 %1373
      %vm1375 = vcmask 7168
      %1376 = vst.msk [vmem:[%s202] sm:$0xff] %vm1375, %v1374
      %v1377 = vmul.f32 %v1368, %v1368
      %v1378 = vmul.f32 %v1369, %v1369
      %v1379 = vmul.f32 %v1370, %v1370
      %v1380 = vadd.f32 %v1377, %v1378
      %v1381 = vadd.f32 %v1380, %v1379
      %1382 = vadd.xlane.f32.xlu0 %v1381
      %v1383 = vpop.xlane.xlu0 %1382
      %1384 = vst.msk [vmem:[%s206] sm:$0xff] %vm1375, %v1383
      %p1385 = scmp.lt.s32.totalorder %s16, 1
      %s1386 = scalar_select %p1385, %s16, 1
      %s1387 = smul.addr %s1386, 8
      %s1388 = scalar_lea.vmem %s3, %s1387
      %p1389 = scmp.lt.s32.totalorder %s16, 1
      %s1390 = scalar_select %p1389, %s16, 1
      %s1391 = smul.addr %s1390, 8
      %s1392 = scalar_lea.vmem %s4, %s1391
      // Predicated region
      $region33: #{conv_block.2} parent=31 // pred_check
        %p1393 = pneg %p102
      $region34: #{conv_block.2} parent=31 // pred_check_branch
        %1395 = sbr.rel (%p1393) target = $region36
      $region35: #{conv_block.2} parent=31 // pred_region
        _
      $region36: #{conv_block.2} parent=31 // pred_fallthru
        _
      // Predicated region
      $region37: #{conv_block.2} parent=31 // pred_check
        %p1396 = pneg %p128
      $region38: #{conv_block.2} parent=31 // pred_check_branch
        %1398 = sbr.rel (%p1396) target = $region40
      $region39: #{conv_block.2} parent=31 // pred_region
        _
      $region40: #{conv_block.2} parent=31 // pred_fallthru
        _
    $region32: #{conv_block.2} parent=5 // pred_fallthru
      _
    %p1399 = scmp.le.s32.totalorder 2, %s11
    // Predicated region
    $region41: #{conv_block.2} parent=5 // pred_check
      %p1400 = pneg %p1399
    $region42: #{conv_block.2} parent=5 // pred_check_branch
      %1402 = sbr.rel (%p1400) target = $region44
    $region43: #{conv_block.2} parent=5 // pred_region
      %s1403 = ssub.s32 %s11, 2
      // Predicated region
      $region45: #{conv_block.2} parent=43 // pred_check
        %p1404 = pneg %p108
      $region46: #{conv_block.2} parent=43 // pred_check_branch
        %1406 = sbr.rel (%p1404) target = $region48
      $region47: #{conv_block.2} parent=43 // pred_region
        %p1407 = scmp.lt.s32.totalorder %s17, 1
        %s1408 = scalar_select %p1407, %s17, 1
        %s1409 = smul.addr %s1408, 8
        %s1410 = scalar_lea.vmem %s3, %s1409
      $region48: #{conv_block.2} parent=43 // pred_fallthru
        _
      // Predicated region
      $region49: #{conv_block.2} parent=43 // pred_check
        %p1411 = pneg %p134
      $region50: #{conv_block.2} parent=43 // pred_check_branch
        %1413 = sbr.rel (%p1411) target = $region52
      $region51: #{conv_block.2} parent=43 // pred_region
        %p1414 = scmp.lt.s32.totalorder %s17, 1
        %s1415 = scalar_select %p1414, %s17, 1
        %s1416 = smul.addr %s1415, 8
        %s1417 = scalar_lea.vmem %s4, %s1416
      $region52: #{conv_block.2} parent=43 // pred_fallthru
        _
    $region44: #{conv_block.2} parent=5 // pred_fallthru
      _
  $region6: #{conv_block.2} parent=0 // loop_footer
    %s15 = sadd.s32 1, %s11
  $region7: #{conv_block.2} parent=0 // loop_footer_branch
    %10 = sbr.rel target = $region3
  $region8: #{conv_block.2} parent=0 // loop_exit
    _

// kernel: conv_block.3
$region0: #{conv_block.3}
  #allocation0 [shape = 'u32[]', space=smem, size = 0x4, offset = 0x4, fixed_abs, tag = 'smem constant byte address 0x4 - core index']
  #allocation1 [shape = 'u32[144,128]{1,0:T(1,128)}', space=vmem, size = 0x12000, scoped, tag = 'internal scratch']
  %s0 = inlined_call_operand.vmem [shape: bf16[2,4,512], index: 0, kind: input, shape index: {}]
  %s1 = inlined_call_operand.vmem [shape: bf16[9,8,4], index: 1, kind: input, shape index: {}]
  %s2 = inlined_call_operand.vmem [shape: f32[8,1], index: 2, kind: input, shape index: {}]
  %s3 = inlined_call_operand.vmem [shape: f32[8,1], index: 3, kind: input, shape index: {}]
  %s4 = inlined_call_operand.vmem [shape: f32[2,8,384], index: 4, kind: output, shape index: {}]
  %s5 = sld [smem:[#allocation0]]
  $region49: #{conv_block.3} parent=0
    _
  %s7 = ssub.s32 1, %s5
  %s8 = scalar_select 0, %s7, %s5
  loop: start=0, step=1, limit=4
  $region2: #{conv_block.3} parent=0 // loop_pre_header
    _
  $region3: #{conv_block.3} parent=0 // loop_header
    %s10 = sphi 0, %s14
    %p11 = scmp.ge.s32.totalorder %s10, 4
    %s20 = sphi 0, %s22
    %s23 = sphi 0, %s20
    %s24 = sphi 0, %s23
    %s40 = sphi 0, %s24
    %s44 = sphi 0, %s44
    %s46 = sphi 0, %s44
    %s47 = sphi 0, %s46
    %s61 = sphi 0, %s47
    %s65 = sphi 0, %s65
    %s67 = sphi 0, %s65
    %s68 = sphi 0, %s67
    %s82 = sphi 0, %s68
    %s86 = sphi 0, %s86
    %s88 = sphi 0, %s86
    %s89 = sphi 0, %s88
    %s103 = sphi 0, %s89
    %s109 = sphi 0, %s111
    %s112 = sphi 0, %s109
    %s113 = sphi 0, %s112
    %s129 = sphi 0, %s113
  $region4: #{conv_block.3} parent=0 // loop_header_branch
    %13 = sbr.rel (%p11) target = $region8
  $region5: #{conv_block.3} parent=0 // loop_body
    %s15 = ssub.s32 %s10, 1
    %s16 = ssub.s32 %s10, 2
    %s17 = sadd.s32 %s10, 1
    %s18 = ssub.s32 %s10, %s17
    %p19 = scmp.eq.s32.totalorder %s18, 0
    %s21 = sadd.s32 %s20, 1
    %s22 = scalar_select %p19, %s20, %s21
    %p25 = pneg %p19
    %p26 = scmp.eq.s32.totalorder %s10, 1
    %p27 = por %p25, %p26
    %p28 = scmp.ne.s32.totalorder %s20, %s23
    %p29 = scmp.eq.s32.totalorder %s10, 0
    %p30 = por %p28, %p29
    %p31 = scmp.ne.s32.totalorder %s20, %s23
    %p32 = scmp.eq.s32.totalorder %s15, 1
    %p33 = por %p31, %p32
    %p34 = scmp.ne.s32.totalorder %s23, %s24
    %p35 = scmp.eq.s32.totalorder %s15, 0
    %p36 = por %p34, %p35
    %p37 = scmp.ne.s32.totalorder %s23, %s24
    %p38 = scmp.eq.s32.totalorder %s16, 1
    %p39 = por %p37, %p38
    %p41 = scmp.ne.s32.totalorder %s24, %s40
    %p42 = scmp.eq.s32.totalorder %s16, 0
    %p43 = por %p41, %p42
    %s45 = sadd.s32 %s44, 1
    %p48 = scmp.eq.s32.totalorder %s10, 1
    %p49 = scmp.ne.s32.totalorder %s44, %s46
    %p50 = scmp.eq.s32.totalorder %s10, 0
    %p51 = por %p49, %p50
    %p52 = scmp.ne.s32.totalorder %s44, %s46
    %p53 = scmp.eq.s32.totalorder %s15, 1
    %p54 = por %p52, %p53
    %p55 = scmp.ne.s32.totalorder %s46, %s47
    %p56 = scmp.eq.s32.totalorder %s15, 0
    %p57 = por %p55, %p56
    %p58 = scmp.ne.s32.totalorder %s46, %s47
    %p59 = scmp.eq.s32.totalorder %s16, 1
    %p60 = por %p58, %p59
    %p62 = scmp.ne.s32.totalorder %s47, %s61
    %p63 = scmp.eq.s32.totalorder %s16, 0
    %p64 = por %p62, %p63
    %s66 = sadd.s32 %s65, 1
    %p69 = scmp.eq.s32.totalorder %s10, 1
    %p70 = scmp.ne.s32.totalorder %s65, %s67
    %p71 = scmp.eq.s32.totalorder %s10, 0
    %p72 = por %p70, %p71
    %p73 = scmp.ne.s32.totalorder %s65, %s67
    %p74 = scmp.eq.s32.totalorder %s15, 1
    %p75 = por %p73, %p74
    %p76 = scmp.ne.s32.totalorder %s67, %s68
    %p77 = scmp.eq.s32.totalorder %s15, 0
    %p78 = por %p76, %p77
    %p79 = scmp.ne.s32.totalorder %s67, %s68
    %p80 = scmp.eq.s32.totalorder %s16, 1
    %p81 = por %p79, %p80
    %p83 = scmp.ne.s32.totalorder %s68, %s82
    %p84 = scmp.eq.s32.totalorder %s16, 0
    %p85 = por %p83, %p84
    %s87 = sadd.s32 %s86, 1
    %p90 = scmp.eq.s32.totalorder %s10, 1
    %p91 = scmp.ne.s32.totalorder %s86, %s88
    %p92 = scmp.eq.s32.totalorder %s10, 0
    %p93 = por %p91, %p92
    %p94 = scmp.ne.s32.totalorder %s86, %s88
    %p95 = scmp.eq.s32.totalorder %s15, 1
    %p96 = por %p94, %p95
    %p97 = scmp.ne.s32.totalorder %s88, %s89
    %p98 = scmp.eq.s32.totalorder %s15, 0
    %p99 = por %p97, %p98
    %p100 = scmp.ne.s32.totalorder %s88, %s89
    %p101 = scmp.eq.s32.totalorder %s16, 1
    %p102 = por %p100, %p101
    %p104 = scmp.ne.s32.totalorder %s89, %s103
    %p105 = scmp.eq.s32.totalorder %s16, 0
    %p106 = por %p104, %p105
    %s107 = ssub.s32 %s10, %s17
    %p108 = scmp.eq.s32.totalorder %s107, 0
    %s110 = sadd.s32 %s109, 1
    %s111 = scalar_select %p108, %s109, %s110
    %p114 = pneg %p108
    %p115 = scmp.eq.s32.totalorder %s10, 1
    %p116 = por %p114, %p115
    %p117 = scmp.ne.s32.totalorder %s109, %s112
    %p118 = scmp.eq.s32.totalorder %s10, 0
    %p119 = por %p117, %p118
    %p120 = scmp.ne.s32.totalorder %s109, %s112
    %p121 = scmp.eq.s32.totalorder %s15, 1
    %p122 = por %p120, %p121
    %p123 = scmp.ne.s32.totalorder %s112, %s113
    %p124 = scmp.eq.s32.totalorder %s15, 0
    %p125 = por %p123, %p124
    %p126 = scmp.ne.s32.totalorder %s112, %s113
    %p127 = scmp.eq.s32.totalorder %s16, 1
    %p128 = por %p126, %p127
    %p130 = scmp.ne.s32.totalorder %s113, %s129
    %p131 = scmp.eq.s32.totalorder %s16, 0
    %p132 = por %p130, %p131
    %p133 = scmp.le.s32.totalorder 1, %s10
    %p134 = scmp.lt.s32.totalorder %s10, 3
    %p135 = pnand %p133, %p134
    %p136 = pneg %p135
    // Predicated region
    $region9: #{conv_block.3} parent=5 // pred_check
      _
    $region10: #{conv_block.3} parent=5 // pred_check_branch
      %138 = sbr.rel (%p135) target = $region12
    $region11: #{conv_block.3} parent=5 // pred_region
      %s139 = ssub.s32 %s10, 1
      // Predicated region
      $region13: #{conv_block.3} parent=11 // pred_check
        %p140 = pneg %p57
      $region14: #{conv_block.3} parent=11 // pred_check_branch
        %142 = sbr.rel (%p140) target = $region16
      $region15: #{conv_block.3} parent=11 // pred_region
        _
      $region16: #{conv_block.3} parent=11 // pred_fallthru
        _
      // Predicated region
      $region17: #{conv_block.3} parent=11 // pred_check
        %p143 = pneg %p78
      $region18: #{conv_block.3} parent=11 // pred_check_branch
        %145 = sbr.rel (%p143) target = $region20
      $region19: #{conv_block.3} parent=11 // pred_region
        _
      $region20: #{conv_block.3} parent=11 // pred_fallthru
        _
      // Predicated region
      $region21: #{conv_block.3} parent=11 // pred_check
        %p146 = pneg %p99
      $region22: #{conv_block.3} parent=11 // pred_check_branch
        %148 = sbr.rel (%p146) target = $region24
      $region23: #{conv_block.3} parent=11 // pred_region
        _
      $region24: #{conv_block.3} parent=11 // pred_fallthru
        _
    $region12: #{conv_block.3} parent=5 // pred_fallthru
      _
    %p149 = scmp.lt.s32.totalorder %s10, 2
    // Predicated region
    $region25: #{conv_block.3} parent=5 // pred_check
      %p150 = pneg %p149
    $region26: #{conv_block.3} parent=5 // pred_check_branch
      %152 = sbr.rel (%p150) target = $region28
    $region27: #{conv_block.3} parent=5 // pred_region
      // Predicated region
      $region29: #{conv_block.3} parent=27 // pred_check
        %p153 = pneg %p30
      $region30: #{conv_block.3} parent=27 // pred_check_branch
        %155 = sbr.rel (%p153) target = $region32
      $region31: #{conv_block.3} parent=27 // pred_region
        %p156 = scmp.lt.s32.totalorder %s10, 1
        %s157 = scalar_select %p156, %s10, 1
        %s158 = smul.addr %s157, 4
        %s159 = smul.addr %s158, 2
        %s160 = scalar_lea.vmem %s0, %s159
      $region32: #{conv_block.3} parent=27 // pred_fallthru
        _
    $region28: #{conv_block.3} parent=5 // pred_fallthru
      _
    %p161 = scmp.le.s32.totalorder 1, %s10
    %p162 = scmp.lt.s32.totalorder %s10, 3
    %p163 = pnand %p161, %p162
    %p164 = pneg %p163
    // Predicated region
    $region33: #{conv_block.3} parent=5 // pred_check
      _
    $region34: #{conv_block.3} parent=5 // pred_check_branch
      %166 = sbr.rel (%p163) target = $region36
    $region35: #{conv_block.3} parent=5 // pred_region
      %s167 = ssub.s32 %s10, 1
      %p168 = scmp.lt.s32.totalorder %s15, 1
      %s169 = scalar_select %p168, %s15, 1
      %s170 = smul.addr %s169, 4
      %s171 = smul.addr %s170, 2
      %s172 = scalar_lea.vmem %s0, %s171
      %p173 = pneg %p36
      %p174 = pneg %p33
      %p175 = pneg %p57
      %p176 = pneg %p54
      %p177 = pneg %p78
      %p178 = pneg %p75
      %p179 = pneg %p99
      %p180 = pneg %p96
      %p181 = pneg %p125
      %p182 = pneg %p122
      %p183 = scmp.lt.s32.totalorder %s15, 1
      %s184 = scalar_select %p183, %s15, 1
      %s185 = smul.addr %s184, 3
      %s186 = smul.addr %s185, 8
      %s187 = scalar_lea.vmem %s4, %s186
      %p188 = scmp.lt.s32.totalorder %s15, 1
      %s189 = scalar_select %p188, %s15, 1
      %s190 = smul.addr %s189, 4
      %s191 = smul.addr %s190, 2
      %s192 = scalar_lea.vmem %s0, %s191
      %p193 = scmp.lt.s32.totalorder %s15, 1
      %s194 = scalar_select %p193, %s15, 1
      %s195 = smul.addr %s194, 3
      %s196 = smul.addr %s195, 8
      %s197 = scalar_lea.vmem %s4, %s196
      %v199 = vld [vmem:[%s192] sm:$0x3f]
      %v200 = vld [vmem:[%s1] sm:$0xf]
      %v201 = vld [vmem:[%s192] sm:$0xff]
      %s202 = scalar_lea.vmem %s1, 4
      %v203 = vld [vmem:[%s202] sm:$0xf]
      %v205 = vcombine.high %v201, %v201
      %v207 = vunpack.c.l.s4 1983009808
      %v208 = vunpack.c.0.s8 %v207
      %v209 = vlaneseq
      %v210 = vshrl.u32 %v209, 7
      %v211 = vsub.s32 %v208, %v210
      %v212 = vrot.slane %v201, %v211
      %v214 = vunpack.c.l.s4 1983009808
      %v215 = vunpack.c.0.s8 %v214
      %v216 = vlaneseq
      %v217 = vshrl.u32 %v216, 7
      %v218 = vsub.s32 %v215, %v217
      %v219 = vrot.slane %v205, %v218
      %v220 = vcombine.high %v212, %v212
      %v221 = vcombine.high %v219, %v219
      %222 = vrot.lane.b32.xlu0 %v212, 127
      %v223 = vpop.permute.xlu0 %222
      %224 = vrot.lane.b32.xlu0 %v220, 127
      %v225 = vpop.permute.xlu0 %224
      %226 = vrot.lane.b32.xlu0 %v219, 127
      %v227 = vpop.permute.xlu0 %226
      %228 = vrot.lane.b32.xlu0 %v221, 127
      %v229 = vpop.permute.xlu0 %228
      %vm230 = vcmask 1039360
      %v231 = vsel %vm230, %v223, %v225
      %v232 = vsel %vm230, %v225, %v227
      %v233 = vsel %vm230, %v227, %v229
      %vm234 = vcmask 31744
      %v236 = vsel %vm234, %v203, 0
      %vm238 = vcmask 1041408
      %v240 = vsel %vm238, %v231, 0
      %v243 = vsel %vm238, %v232, 0
      %v246 = vsel %vm238, %v233, 0
      %248 = vmatprep.subr.bf16.mxu0 0
      %249 = vmatpush1.bf16.msra.mxu0 0
      %250 = vmatprep.subr.bf16.mxu0 0
      %251 = vmatpush1.bf16.msra.mxu0 0
      %252 = vmatprep.subr.bf16.mxu0 0
      %253 = vmatpush1.bf16.msra.mxu0 0
      %254 = vmatprep.subr.bf16.mxu0 0
      %255 = vmatpush1.bf16.msra.mxu0 0
      %256 = vmatprep.subr.bf16.mxu0 0
      %257 = vmatpush1.bf16.msra.mxu0 0
      %258 = vmatprep.subr.bf16.mxu0 0
      %259 = vmatpush1.bf16.msra.mxu0 0
      %260 = vmatprep.subr.bf16.mxu0 0
      %261 = vmatpush1.bf16.msra.mxu0 0
      %262 = vmatprep.subr.bf16.mxu0 %v243
      %263 = vmatpush1.bf16.msra.mxu0 %v240
      %264 = vmatprep.subr.bf16.mxu0 0
      %265 = vmatpush2.bf16.msra.mxu0 0
      %266 = vmatprep.subr.bf16.mxu0 0
      %267 = vmatpush2.bf16.msra.mxu0 0
      %268 = vmatprep.subr.bf16.mxu0 0
      %269 = vmatpush2.bf16.msra.mxu0 0
      %270 = vmatprep.subr.bf16.mxu0 0
      %271 = vmatpush2.bf16.msra.mxu0 0
      %272 = vmatprep.subr.bf16.mxu0 0
      %273 = vmatpush2.bf16.msra.mxu0 0
      %274 = vmatprep.subr.bf16.mxu0 0
      %275 = vmatpush2.bf16.msra.mxu0 0
      %276 = vmatprep.subr.bf16.mxu0 0
      %277 = vmatpush2.bf16.msra.mxu0 0
      %278 = vmatprep.subr.bf16.mxu0 0
      %279 = vmatpush2.bf16.msra.mxu0 0
      %280 = vmatprep.mubr.bf16.mxu0 0
      %281 = vmatmul.mubr.bf16.gmra.mxu0 %v236
      %v282 = vpop.f32.mrf.mxu0
      %v283 = vadd.f32 0.0, %v282
      %v284 = vpop.f32.mrf.mxu0
      %v285 = vadd.f32 0.0, %v284
      %v286 = vpop.f32.mrf.mxu0
      %v287 = vpop.f32.mrf.mxu0
      %288 = vdwg.mxu0
      %289 = vmatprep.subr.bf16.mxu0 0
      %290 = vmatpush1.bf16.msra.mxu0 0
      %291 = vmatprep.subr.bf16.mxu0 0
      %292 = vmatpush1.bf16.msra.mxu0 0
      %293 = vmatprep.subr.bf16.mxu0 0
      %294 = vmatpush1.bf16.msra.mxu0 0
      %295 = vmatprep.subr.bf16.mxu0 0
      %296 = vmatpush1.bf16.msra.mxu0 0
      %297 = vmatprep.subr.bf16.mxu0 0
      %298 = vmatpush1.bf16.msra.mxu0 0
      %299 = vmatprep.subr.bf16.mxu0 0
      %300 = vmatpush1.bf16.msra.mxu0 0
      %301 = vmatprep.subr.bf16.mxu0 0
      %302 = vmatpush1.bf16.msra.mxu0 0
      %303 = vmatprep.subr.bf16.mxu0 0
      %304 = vmatpush1.bf16.msra.mxu0 %v246
      %305 = vmatprep.subr.bf16.mxu0 0
      %306 = vmatpush2.bf16.msra.mxu0 0
      %307 = vmatprep.subr.bf16.mxu0 0
      %308 = vmatpush2.bf16.msra.mxu0 0
      %309 = vmatprep.subr.bf16.mxu0 0
      %310 = vmatpush2.bf16.msra.mxu0 0
      %311 = vmatprep.subr.bf16.mxu0 0
      %312 = vmatpush2.bf16.msra.mxu0 0
      %313 = vmatprep.subr.bf16.mxu0 0
      %314 = vmatpush2.bf16.msra.mxu0 0
      %315 = vmatprep.subr.bf16.mxu0 0
      %316 = vmatpush2.bf16.msra.mxu0 0
      %317 = vmatprep.subr.bf16.mxu0 0
      %318 = vmatpush2.bf16.msra.mxu0 0
      %319 = vmatprep.subr.bf16.mxu0 0
      %320 = vmatpush2.bf16.msra.mxu0 0
      %321 = vmatprep.mubr.bf16.mxu0 0
      %322 = vmatmul.mubr.bf16.gmra.mxu0 %v236
      %v323 = vpop.f32.mrf.mxu0
      %v324 = vadd.f32 0.0, %v323
      %v325 = vpop.f32.mrf.mxu0
      %v326 = vpop.f32.mrf.mxu0
      %v327 = vpop.f32.mrf.mxu0
      %328 = vdwg.mxu0
      %v330 = vcombine.high %v199, %v199
      %v332 = vunpack.c.l.s4 1983009808
      %v333 = vunpack.c.0.s8 %v332
      %v334 = vlaneseq
      %v335 = vshrl.u32 %v334, 7
      %v336 = vsub.s32 %v333, %v335
      %v337 = vrot.slane %v199, %v336
      %v339 = vunpack.c.l.s4 1983009808
      %v340 = vunpack.c.0.s8 %v339
      %v341 = vlaneseq
      %v342 = vshrl.u32 %v341, 7
      %v343 = vsub.s32 %v340, %v342
      %v344 = vrot.slane %v330, %v343
      %v345 = vcombine.high %v337, %v337
      %v347 = vsel %vm234, %v200, 0
      %v350 = vsel %vm238, %v337, 0
      %v353 = vsel %vm238, %v345, 0
      %v356 = vsel %vm238, %v344, 0
      %358 = vmatprep.subr.bf16.mxu0 0
      %359 = vmatpush1.bf16.msra.mxu0 0
      %360 = vmatprep.subr.bf16.mxu0 0
      %361 = vmatpush1.bf16.msra.mxu0 0
      %362 = vmatprep.subr.bf16.mxu0 0
      %363 = vmatpush1.bf16.msra.mxu0 0
      %364 = vmatprep.subr.bf16.mxu0 0
      %365 = vmatpush1.bf16.msra.mxu0 0
      %366 = vmatprep.subr.bf16.mxu0 0
      %367 = vmatpush1.bf16.msra.mxu0 0
      %368 = vmatprep.subr.bf16.mxu0 0
      %369 = vmatpush1.bf16.msra.mxu0 0
      %370 = vmatprep.subr.bf16.mxu0 0
      %371 = vmatpush1.bf16.msra.mxu0 0
      %372 = vmatprep.subr.bf16.mxu0 %v353
      %373 = vmatpush1.bf16.msra.mxu0 %v350
      %374 = vmatprep.subr.bf16.mxu0 0
      %375 = vmatpush2.bf16.msra.mxu0 0
      %376 = vmatprep.subr.bf16.mxu0 0
      %377 = vmatpush2.bf16.msra.mxu0 0
      %378 = vmatprep.subr.bf16.mxu0 0
      %379 = vmatpush2.bf16.msra.mxu0 0
      %380 = vmatprep.subr.bf16.mxu0 0
      %381 = vmatpush2.bf16.msra.mxu0 0
      %382 = vmatprep.subr.bf16.mxu0 0
      %383 = vmatpush2.bf16.msra.mxu0 0
      %384 = vmatprep.subr.bf16.mxu0 0
      %385 = vmatpush2.bf16.msra.mxu0 0
      %386 = vmatprep.subr.bf16.mxu0 0
      %387 = vmatpush2.bf16.msra.mxu0 0
      %388 = vmatprep.subr.bf16.mxu0 0
      %389 = vmatpush2.bf16.msra.mxu0 0
      %390 = vmatprep.mubr.bf16.mxu0 0
      %391 = vmatmul.mubr.bf16.gmra.mxu0 %v347
      %v392 = vpop.f32.mrf.mxu0
      %v393 = vadd.f32 %v283, %v392
      %v394 = vpop.f32.mrf.mxu0
      %v395 = vadd.f32 %v285, %v394
      %v396 = vpop.f32.mrf.mxu0
      %v397 = vpop.f32.mrf.mxu0
      %398 = vdwg.mxu0
      %399 = vmatprep.subr.bf16.mxu0 0
      %400 = vmatpush1.bf16.msra.mxu0 0
      %401 = vmatprep.subr.bf16.mxu0 0
      %402 = vmatpush1.bf16.msra.mxu0 0
      %403 = vmatprep.subr.bf16.mxu0 0
      %404 = vmatpush1.bf16.msra.mxu0 0
      %405 = vmatprep.subr.bf16.mxu0 0
      %406 = vmatpush1.bf16.msra.mxu0 0
      %407 = vmatprep.subr.bf16.mxu0 0
      %408 = vmatpush1.bf16.msra.mxu0 0
      %409 = vmatprep.subr.bf16.mxu0 0
      %410 = vmatpush1.bf16.msra.mxu0 0
      %411 = vmatprep.subr.bf16.mxu0 0
      %412 = vmatpush1.bf16.msra.mxu0 0
      %413 = vmatprep.subr.bf16.mxu0 0
      %414 = vmatpush1.bf16.msra.mxu0 %v356
      %415 = vmatprep.subr.bf16.mxu0 0
      %416 = vmatpush2.bf16.msra.mxu0 0
      %417 = vmatprep.subr.bf16.mxu0 0
      %418 = vmatpush2.bf16.msra.mxu0 0
      %419 = vmatprep.subr.bf16.mxu0 0
      %420 = vmatpush2.bf16.msra.mxu0 0
      %421 = vmatprep.subr.bf16.mxu0 0
      %422 = vmatpush2.bf16.msra.mxu0 0
      %423 = vmatprep.subr.bf16.mxu0 0
      %424 = vmatpush2.bf16.msra.mxu0 0
      %425 = vmatprep.subr.bf16.mxu0 0
      %426 = vmatpush2.bf16.msra.mxu0 0
      %427 = vmatprep.subr.bf16.mxu0 0
      %428 = vmatpush2.bf16.msra.mxu0 0
      %429 = vmatprep.subr.bf16.mxu0 0
      %430 = vmatpush2.bf16.msra.mxu0 0
      %431 = vmatprep.mubr.bf16.mxu0 0
      %432 = vmatmul.mubr.bf16.gmra.mxu0 %v347
      %v433 = vpop.f32.mrf.mxu0
      %v434 = vadd.f32 %v324, %v433
      %v435 = vpop.f32.mrf.mxu0
      %v436 = vpop.f32.mrf.mxu0
      %v437 = vpop.f32.mrf.mxu0
      %438 = vdwg.mxu0
      %v439 = vld [vmem:[%s192] sm:$0xff]
      %s440 = scalar_lea.vmem %s1, 8
      %v441 = vld [vmem:[%s440] sm:$0xf]
      %v443 = vcombine.high %v439, %v439
      %v445 = vunpack.c.l.s4 1983009808
      %v446 = vunpack.c.0.s8 %v445
      %v447 = vlaneseq
      %v448 = vshrl.u32 %v447, 7
      %v449 = vsub.s32 %v446, %v448
      %v450 = vrot.slane %v439, %v449
      %v452 = vunpack.c.l.s4 1983009808
      %v453 = vunpack.c.0.s8 %v452
      %v454 = vlaneseq
      %v455 = vshrl.u32 %v454, 7
      %v456 = vsub.s32 %v453, %v455
      %v457 = vrot.slane %v443, %v456
      %v458 = vcombine.high %v450, %v450
      %v459 = vcombine.high %v457, %v457
      %460 = vrot.lane.b32.xlu0 %v450, 126
      %v461 = vpop.permute.xlu0 %460
      %462 = vrot.lane.b32.xlu0 %v458, 126
      %v463 = vpop.permute.xlu0 %462
      %464 = vrot.lane.b32.xlu0 %v457, 126
      %v465 = vpop.permute.xlu0 %464
      %466 = vrot.lane.b32.xlu0 %v459, 126
      %v467 = vpop.permute.xlu0 %466
      %vm468 = vcmask 1031168
      %v469 = vsel %vm468, %v461, %v463
      %v470 = vsel %vm468, %v463, %v465
      %v471 = vsel %vm468, %v465, %v467
      %v473 = vsel %vm234, %v441, 0
      %v476 = vsel %vm238, %v469, 0
      %v479 = vsel %vm238, %v470, 0
      %v482 = vsel %vm238, %v471, 0
      %484 = vmatprep.subr.bf16.mxu0 0
      %485 = vmatpush1.bf16.msra.mxu0 0
      %486 = vmatprep.subr.bf16.mxu0 0
      %487 = vmatpush1.bf16.msra.mxu0 0
      %488 = vmatprep.subr.bf16.mxu0 0
      %489 = vmatpush1.bf16.msra.mxu0 0
      %490 = vmatprep.subr.bf16.mxu0 0
      %491 = vmatpush1.bf16.msra.mxu0 0
      %492 = vmatprep.subr.bf16.mxu0 0
      %493 = vmatpush1.bf16.msra.mxu0 0
      %494 = vmatprep.subr.bf16.mxu0 0
      %495 = vmatpush1.bf16.msra.mxu0 0
      %496 = vmatprep.subr.bf16.mxu0 0
      %497 = vmatpush1.bf16.msra.mxu0 0
      %498 = vmatprep.subr.bf16.mxu0 %v479
      %499 = vmatpush1.bf16.msra.mxu0 %v476
      %500 = vmatprep.subr.bf16.mxu0 0
      %501 = vmatpush2.bf16.msra.mxu0 0
      %502 = vmatprep.subr.bf16.mxu0 0
      %503 = vmatpush2.bf16.msra.mxu0 0
      %504 = vmatprep.subr.bf16.mxu0 0
      %505 = vmatpush2.bf16.msra.mxu0 0
      %506 = vmatprep.subr.bf16.mxu0 0
      %507 = vmatpush2.bf16.msra.mxu0 0
      %508 = vmatprep.subr.bf16.mxu0 0
      %509 = vmatpush2.bf16.msra.mxu0 0
      %510 = vmatprep.subr.bf16.mxu0 0
      %511 = vmatpush2.bf16.msra.mxu0 0
      %512 = vmatprep.subr.bf16.mxu0 0
      %513 = vmatpush2.bf16.msra.mxu0 0
      %514 = vmatprep.subr.bf16.mxu0 0
      %515 = vmatpush2.bf16.msra.mxu0 0
      %516 = vmatprep.mubr.bf16.mxu0 0
      %517 = vmatmul.mubr.bf16.gmra.mxu0 %v473
      %v518 = vpop.f32.mrf.mxu0
      %v519 = vadd.f32 0.0, %v518
      %v520 = vpop.f32.mrf.mxu0
      %v521 = vadd.f32 0.0, %v520
      %v522 = vpop.f32.mrf.mxu0
      %v523 = vpop.f32.mrf.mxu0
      %524 = vdwg.mxu0
      %525 = vmatprep.subr.bf16.mxu0 0
      %526 = vmatpush1.bf16.msra.mxu0 0
      %527 = vmatprep.subr.bf16.mxu0 0
      %528 = vmatpush1.bf16.msra.mxu0 0
      %529 = vmatprep.subr.bf16.mxu0 0
      %530 = vmatpush1.bf16.msra.mxu0 0
      %531 = vmatprep.subr.bf16.mxu0 0
      %532 = vmatpush1.bf16.msra.mxu0 0
      %533 = vmatprep.subr.bf16.mxu0 0
      %534 = vmatpush1.bf16.msra.mxu0 0
      %535 = vmatprep.subr.bf16.mxu0 0
      %536 = vmatpush1.bf16.msra.mxu0 0
      %537 = vmatprep.subr.bf16.mxu0 0
      %538 = vmatpush1.bf16.msra.mxu0 0
      %539 = vmatprep.subr.bf16.mxu0 0
      %540 = vmatpush1.bf16.msra.mxu0 %v482
      %541 = vmatprep.subr.bf16.mxu0 0
      %542 = vmatpush2.bf16.msra.mxu0 0
      %543 = vmatprep.subr.bf16.mxu0 0
      %544 = vmatpush2.bf16.msra.mxu0 0
      %545 = vmatprep.subr.bf16.mxu0 0
      %546 = vmatpush2.bf16.msra.mxu0 0
      %547 = vmatprep.subr.bf16.mxu0 0
      %548 = vmatpush2.bf16.msra.mxu0 0
      %549 = vmatprep.subr.bf16.mxu0 0
      %550 = vmatpush2.bf16.msra.mxu0 0
      %551 = vmatprep.subr.bf16.mxu0 0
      %552 = vmatpush2.bf16.msra.mxu0 0
      %553 = vmatprep.subr.bf16.mxu0 0
      %554 = vmatpush2.bf16.msra.mxu0 0
      %555 = vmatprep.subr.bf16.mxu0 0
      %556 = vmatpush2.bf16.msra.mxu0 0
      %557 = vmatprep.mubr.bf16.mxu0 0
      %558 = vmatmul.mubr.bf16.gmra.mxu0 %v473
      %v559 = vpop.f32.mrf.mxu0
      %v560 = vadd.f32 0.0, %v559
      %v561 = vpop.f32.mrf.mxu0
      %v562 = vpop.f32.mrf.mxu0
      %v563 = vpop.f32.mrf.mxu0
      %564 = vdwg.mxu0
      %v565 = vadd.f32 %v393, %v519
      %v566 = vadd.f32 %v395, %v521
      %v567 = vadd.f32 %v434, %v560
      %v568 = vld [vmem:[%s192] sm:$0xff]
      %s569 = scalar_lea.vmem %s1, 12
      %v570 = vld [vmem:[%s569] sm:$0xf]
      %v572 = vcombine.high %v568, %v568
      %v574 = vunpack.c.l.s4 1983009808
      %v575 = vunpack.c.0.s8 %v574
      %v576 = vlaneseq
      %v577 = vshrl.u32 %v576, 7
      %v578 = vsub.s32 %v575, %v577
      %v579 = vrot.slane %v568, %v578
      %v581 = vunpack.c.l.s4 1983009808
      %v582 = vunpack.c.0.s8 %v581
      %v583 = vlaneseq
      %v584 = vshrl.u32 %v583, 7
      %v585 = vsub.s32 %v582, %v584
      %v586 = vrot.slane %v572, %v585
      %v587 = vcombine.high %v579, %v579
      %v588 = vcombine.high %v586, %v586
      %589 = vrot.lane.b32.xlu0 %v579, 110
      %v590 = vpop.permute.xlu0 %589
      %591 = vrot.lane.b32.xlu0 %v587, 110
      %v592 = vpop.permute.xlu0 %591
      %593 = vrot.lane.b32.xlu0 %v586, 110
      %v594 = vpop.permute.xlu0 %593
      %595 = vrot.lane.b32.xlu0 %v588, 110
      %v596 = vpop.permute.xlu0 %595
      %vm597 = vcmask 900096
      %v598 = vsel %vm597, %v590, %v592
      %v599 = vsel %vm597, %v592, %v594
      %v600 = vsel %vm597, %v594, %v596
      %v602 = vsel %vm234, %v570, 0
      %v605 = vsel %vm238, %v598, 0
      %v608 = vsel %vm238, %v599, 0
      %v611 = vsel %vm238, %v600, 0
      %613 = vmatprep.subr.bf16.mxu0 0
      %614 = vmatpush1.bf16.msra.mxu0 0
      %615 = vmatprep.subr.bf16.mxu0 0
      %616 = vmatpush1.bf16.msra.mxu0 0
      %617 = vmatprep.subr.bf16.mxu0 0
      %618 = vmatpush1.bf16.msra.mxu0 0
      %619 = vmatprep.subr.bf16.mxu0 0
      %620 = vmatpush1.bf16.msra.mxu0 0
      %621 = vmatprep.subr.bf16.mxu0 0
      %622 = vmatpush1.bf16.msra.mxu0 0
      %623 = vmatprep.subr.bf16.mxu0 0
      %624 = vmatpush1.bf16.msra.mxu0 0
      %625 = vmatprep.subr.bf16.mxu0 0
      %626 = vmatpush1.bf16.msra.mxu0 0
      %627 = vmatprep.subr.bf16.mxu0 %v608
      %628 = vmatpush1.bf16.msra.mxu0 %v605
      %629 = vmatprep.subr.bf16.mxu0 0
      %630 = vmatpush2.bf16.msra.mxu0 0
      %631 = vmatprep.subr.bf16.mxu0 0
      %632 = vmatpush2.bf16.msra.mxu0 0
      %633 = vmatprep.subr.bf16.mxu0 0
      %634 = vmatpush2.bf16.msra.mxu0 0
      %635 = vmatprep.subr.bf16.mxu0 0
      %636 = vmatpush2.bf16.msra.mxu0 0
      %637 = vmatprep.subr.bf16.mxu0 0
      %638 = vmatpush2.bf16.msra.mxu0 0
      %639 = vmatprep.subr.bf16.mxu0 0
      %640 = vmatpush2.bf16.msra.mxu0 0
      %641 = vmatprep.subr.bf16.mxu0 0
      %642 = vmatpush2.bf16.msra.mxu0 0
      %643 = vmatprep.subr.bf16.mxu0 0
      %644 = vmatpush2.bf16.msra.mxu0 0
      %645 = vmatprep.mubr.bf16.mxu0 0
      %646 = vmatmul.mubr.bf16.gmra.mxu0 %v602
      %v647 = vpop.f32.mrf.mxu0
      %v648 = vadd.f32 0.0, %v647
      %v649 = vpop.f32.mrf.mxu0
      %v650 = vadd.f32 0.0, %v649
      %v651 = vpop.f32.mrf.mxu0
      %v652 = vpop.f32.mrf.mxu0
      %653 = vdwg.mxu0
      %654 = vmatprep.subr.bf16.mxu0 0
      %655 = vmatpush1.bf16.msra.mxu0 0
      %656 = vmatprep.subr.bf16.mxu0 0
      %657 = vmatpush1.bf16.msra.mxu0 0
      %658 = vmatprep.subr.bf16.mxu0 0
      %659 = vmatpush1.bf16.msra.mxu0 0
      %660 = vmatprep.subr.bf16.mxu0 0
      %661 = vmatpush1.bf16.msra.mxu0 0
      %662 = vmatprep.subr.bf16.mxu0 0
      %663 = vmatpush1.bf16.msra.mxu0 0
      %664 = vmatprep.subr.bf16.mxu0 0
      %665 = vmatpush1.bf16.msra.mxu0 0
      %666 = vmatprep.subr.bf16.mxu0 0
      %667 = vmatpush1.bf16.msra.mxu0 0
      %668 = vmatprep.subr.bf16.mxu0 0
      %669 = vmatpush1.bf16.msra.mxu0 %v611
      %670 = vmatprep.subr.bf16.mxu0 0
      %671 = vmatpush2.bf16.msra.mxu0 0
      %672 = vmatprep.subr.bf16.mxu0 0
      %673 = vmatpush2.bf16.msra.mxu0 0
      %674 = vmatprep.subr.bf16.mxu0 0
      %675 = vmatpush2.bf16.msra.mxu0 0
      %676 = vmatprep.subr.bf16.mxu0 0
      %677 = vmatpush2.bf16.msra.mxu0 0
      %678 = vmatprep.subr.bf16.mxu0 0
      %679 = vmatpush2.bf16.msra.mxu0 0
      %680 = vmatprep.subr.bf16.mxu0 0
      %681 = vmatpush2.bf16.msra.mxu0 0
      %682 = vmatprep.subr.bf16.mxu0 0
      %683 = vmatpush2.bf16.msra.mxu0 0
      %684 = vmatprep.subr.bf16.mxu0 0
      %685 = vmatpush2.bf16.msra.mxu0 0
      %686 = vmatprep.mubr.bf16.mxu0 0
      %687 = vmatmul.mubr.bf16.gmra.mxu0 %v602
      %v688 = vpop.f32.mrf.mxu0
      %v689 = vadd.f32 0.0, %v688
      %v690 = vpop.f32.mrf.mxu0
      %v691 = vpop.f32.mrf.mxu0
      %v692 = vpop.f32.mrf.mxu0
      %693 = vdwg.mxu0
      %v694 = vadd.f32 %v565, %v648
      %v695 = vadd.f32 %v566, %v650
      %v696 = vadd.f32 %v567, %v689
      %v697 = vld [vmem:[%s192] sm:$0xff]
      %s698 = scalar_lea.vmem %s1, 16
      %v699 = vld [vmem:[%s698] sm:$0xf]
      %v701 = vcombine.high %v697, %v697
      %v703 = vunpack.c.l.s4 1983009808
      %v704 = vunpack.c.0.s8 %v703
      %v705 = vlaneseq
      %v706 = vshrl.u32 %v705, 7
      %v707 = vsub.s32 %v704, %v706
      %v708 = vrot.slane %v697, %v707
      %v710 = vunpack.c.l.s4 1983009808
      %v711 = vunpack.c.0.s8 %v710
      %v712 = vlaneseq
      %v713 = vshrl.u32 %v712, 7
      %v714 = vsub.s32 %v711, %v713
      %v715 = vrot.slane %v701, %v714
      %v716 = vcombine.high %v708, %v708
      %v717 = vcombine.high %v715, %v715
      %718 = vrot.lane.b32.xlu0 %v708, 109
      %v719 = vpop.permute.xlu0 %718
      %720 = vrot.lane.b32.xlu0 %v716, 109
      %v721 = vpop.permute.xlu0 %720
      %722 = vrot.lane.b32.xlu0 %v715, 109
      %v723 = vpop.permute.xlu0 %722
      %724 = vrot.lane.b32.xlu0 %v717, 109
      %v725 = vpop.permute.xlu0 %724
      %vm726 = vcmask 891904
      %v727 = vsel %vm726, %v719, %v721
      %v728 = vsel %vm726, %v721, %v723
      %v729 = vsel %vm726, %v723, %v725
      %v731 = vsel %vm234, %v699, 0
      %v734 = vsel %vm238, %v727, 0
      %v737 = vsel %vm238, %v728, 0
      %v740 = vsel %vm238, %v729, 0
      %742 = vmatprep.subr.bf16.mxu0 0
      %743 = vmatpush1.bf16.msra.mxu0 0
      %744 = vmatprep.subr.bf16.mxu0 0
      %745 = vmatpush1.bf16.msra.mxu0 0
      %746 = vmatprep.subr.bf16.mxu0 0
      %747 = vmatpush1.bf16.msra.mxu0 0
      %748 = vmatprep.subr.bf16.mxu0 0
      %749 = vmatpush1.bf16.msra.mxu0 0
      %750 = vmatprep.subr.bf16.mxu0 0
      %751 = vmatpush1.bf16.msra.mxu0 0
      %752 = vmatprep.subr.bf16.mxu0 0
      %753 = vmatpush1.bf16.msra.mxu0 0
      %754 = vmatprep.subr.bf16.mxu0 0
      %755 = vmatpush1.bf16.msra.mxu0 0
      %756 = vmatprep.subr.bf16.mxu0 %v737
      %757 = vmatpush1.bf16.msra.mxu0 %v734
      %758 = vmatprep.subr.bf16.mxu0 0
      %759 = vmatpush2.bf16.msra.mxu0 0
      %760 = vmatprep.subr.bf16.mxu0 0
      %761 = vmatpush2.bf16.msra.mxu0 0
      %762 = vmatprep.subr.bf16.mxu0 0
      %763 = vmatpush2.bf16.msra.mxu0 0
      %764 = vmatprep.subr.bf16.mxu0 0
      %765 = vmatpush2.bf16.msra.mxu0 0
      %766 = vmatprep.subr.bf16.mxu0 0
      %767 = vmatpush2.bf16.msra.mxu0 0
      %768 = vmatprep.subr.bf16.mxu0 0
      %769 = vmatpush2.bf16.msra.mxu0 0
      %770 = vmatprep.subr.bf16.mxu0 0
      %771 = vmatpush2.bf16.msra.mxu0 0
      %772 = vmatprep.subr.bf16.mxu0 0
      %773 = vmatpush2.bf16.msra.mxu0 0
      %774 = vmatprep.mubr.bf16.mxu0 0
      %775 = vmatmul.mubr.bf16.gmra.mxu0 %v731
      %v776 = vpop.f32.mrf.mxu0
      %v777 = vadd.f32 0.0, %v776
      %v778 = vpop.f32.mrf.mxu0
      %v779 = vadd.f32 0.0, %v778
      %v780 = vpop.f32.mrf.mxu0
      %v781 = vpop.f32.mrf.mxu0
      %782 = vdwg.mxu0
      %783 = vmatprep.subr.bf16.mxu0 0
      %784 = vmatpush1.bf16.msra.mxu0 0
      %785 = vmatprep.subr.bf16.mxu0 0
      %786 = vmatpush1.bf16.msra.mxu0 0
      %787 = vmatprep.subr.bf16.mxu0 0
      %788 = vmatpush1.bf16.msra.mxu0 0
      %789 = vmatprep.subr.bf16.mxu0 0
      %790 = vmatpush1.bf16.msra.mxu0 0
      %791 = vmatprep.subr.bf16.mxu0 0
      %792 = vmatpush1.bf16.msra.mxu0 0
      %793 = vmatprep.subr.bf16.mxu0 0
      %794 = vmatpush1.bf16.msra.mxu0 0
      %795 = vmatprep.subr.bf16.mxu0 0
      %796 = vmatpush1.bf16.msra.mxu0 0
      %797 = vmatprep.subr.bf16.mxu0 0
      %798 = vmatpush1.bf16.msra.mxu0 %v740
      %799 = vmatprep.subr.bf16.mxu0 0
      %800 = vmatpush2.bf16.msra.mxu0 0
      %801 = vmatprep.subr.bf16.mxu0 0
      %802 = vmatpush2.bf16.msra.mxu0 0
      %803 = vmatprep.subr.bf16.mxu0 0
      %804 = vmatpush2.bf16.msra.mxu0 0
      %805 = vmatprep.subr.bf16.mxu0 0
      %806 = vmatpush2.bf16.msra.mxu0 0
      %807 = vmatprep.subr.bf16.mxu0 0
      %808 = vmatpush2.bf16.msra.mxu0 0
      %809 = vmatprep.subr.bf16.mxu0 0
      %810 = vmatpush2.bf16.msra.mxu0 0
      %811 = vmatprep.subr.bf16.mxu0 0
      %812 = vmatpush2.bf16.msra.mxu0 0
      %813 = vmatprep.subr.bf16.mxu0 0
      %814 = vmatpush2.bf16.msra.mxu0 0
      %815 = vmatprep.mubr.bf16.mxu0 0
      %816 = vmatmul.mubr.bf16.gmra.mxu0 %v731
      %v817 = vpop.f32.mrf.mxu0
      %v818 = vadd.f32 0.0, %v817
      %v819 = vpop.f32.mrf.mxu0
      %v820 = vpop.f32.mrf.mxu0
      %v821 = vpop.f32.mrf.mxu0
      %822 = vdwg.mxu0
      %v823 = vadd.f32 %v694, %v777
      %v824 = vadd.f32 %v695, %v779
      %v825 = vadd.f32 %v696, %v818
      %v826 = vld [vmem:[%s192] sm:$0xff]
      %s827 = scalar_lea.vmem %s1, 20
      %v828 = vld [vmem:[%s827] sm:$0xf]
      %v830 = vcombine.high %v826, %v826
      %v832 = vunpack.c.l.s4 1983009808
      %v833 = vunpack.c.0.s8 %v832
      %v834 = vlaneseq
      %v835 = vshrl.u32 %v834, 7
      %v836 = vsub.s32 %v833, %v835
      %v837 = vrot.slane %v826, %v836
      %v839 = vunpack.c.l.s4 1983009808
      %v840 = vunpack.c.0.s8 %v839
      %v841 = vlaneseq
      %v842 = vshrl.u32 %v841, 7
      %v843 = vsub.s32 %v840, %v842
      %v844 = vrot.slane %v830, %v843
      %v845 = vcombine.high %v837, %v837
      %v846 = vcombine.high %v844, %v844
      %847 = vrot.lane.b32.xlu0 %v837, 108
      %v848 = vpop.permute.xlu0 %847
      %849 = vrot.lane.b32.xlu0 %v845, 108
      %v850 = vpop.permute.xlu0 %849
      %851 = vrot.lane.b32.xlu0 %v844, 108
      %v852 = vpop.permute.xlu0 %851
      %853 = vrot.lane.b32.xlu0 %v846, 108
      %v854 = vpop.permute.xlu0 %853
      %vm855 = vcmask 883712
      %v856 = vsel %vm855, %v848, %v850
      %v857 = vsel %vm855, %v850, %v852
      %v858 = vsel %vm855, %v852, %v854
      %v860 = vsel %vm234, %v828, 0
      %v863 = vsel %vm238, %v856, 0
      %v866 = vsel %vm238, %v857, 0
      %v869 = vsel %vm238, %v858, 0
      %871 = vmatprep.subr.bf16.mxu0 0
      %872 = vmatpush1.bf16.msra.mxu0 0
      %873 = vmatprep.subr.bf16.mxu0 0
      %874 = vmatpush1.bf16.msra.mxu0 0
      %875 = vmatprep.subr.bf16.mxu0 0
      %876 = vmatpush1.bf16.msra.mxu0 0
      %877 = vmatprep.subr.bf16.mxu0 0
      %878 = vmatpush1.bf16.msra.mxu0 0
      %879 = vmatprep.subr.bf16.mxu0 0
      %880 = vmatpush1.bf16.msra.mxu0 0
      %881 = vmatprep.subr.bf16.mxu0 0
      %882 = vmatpush1.bf16.msra.mxu0 0
      %883 = vmatprep.subr.bf16.mxu0 0
      %884 = vmatpush1.bf16.msra.mxu0 0
      %885 = vmatprep.subr.bf16.mxu0 %v866
      %886 = vmatpush1.bf16.msra.mxu0 %v863
      %887 = vmatprep.subr.bf16.mxu0 0
      %888 = vmatpush2.bf16.msra.mxu0 0
      %889 = vmatprep.subr.bf16.mxu0 0
      %890 = vmatpush2.bf16.msra.mxu0 0
      %891 = vmatprep.subr.bf16.mxu0 0
      %892 = vmatpush2.bf16.msra.mxu0 0
      %893 = vmatprep.subr.bf16.mxu0 0
      %894 = vmatpush2.bf16.msra.mxu0 0
      %895 = vmatprep.subr.bf16.mxu0 0
      %896 = vmatpush2.bf16.msra.mxu0 0
      %897 = vmatprep.subr.bf16.mxu0 0
      %898 = vmatpush2.bf16.msra.mxu0 0
      %899 = vmatprep.subr.bf16.mxu0 0
      %900 = vmatpush2.bf16.msra.mxu0 0
      %901 = vmatprep.subr.bf16.mxu0 0
      %902 = vmatpush2.bf16.msra.mxu0 0
      %903 = vmatprep.mubr.bf16.mxu0 0
      %904 = vmatmul.mubr.bf16.gmra.mxu0 %v860
      %v905 = vpop.f32.mrf.mxu0
      %v906 = vadd.f32 0.0, %v905
      %v907 = vpop.f32.mrf.mxu0
      %v908 = vadd.f32 0.0, %v907
      %v909 = vpop.f32.mrf.mxu0
      %v910 = vpop.f32.mrf.mxu0
      %911 = vdwg.mxu0
      %912 = vmatprep.subr.bf16.mxu0 0
      %913 = vmatpush1.bf16.msra.mxu0 0
      %914 = vmatprep.subr.bf16.mxu0 0
      %915 = vmatpush1.bf16.msra.mxu0 0
      %916 = vmatprep.subr.bf16.mxu0 0
      %917 = vmatpush1.bf16.msra.mxu0 0
      %918 = vmatprep.subr.bf16.mxu0 0
      %919 = vmatpush1.bf16.msra.mxu0 0
      %920 = vmatprep.subr.bf16.mxu0 0
      %921 = vmatpush1.bf16.msra.mxu0 0
      %922 = vmatprep.subr.bf16.mxu0 0
      %923 = vmatpush1.bf16.msra.mxu0 0
      %924 = vmatprep.subr.bf16.mxu0 0
      %925 = vmatpush1.bf16.msra.mxu0 0
      %926 = vmatprep.subr.bf16.mxu0 0
      %927 = vmatpush1.bf16.msra.mxu0 %v869
      %928 = vmatprep.subr.bf16.mxu0 0
      %929 = vmatpush2.bf16.msra.mxu0 0
      %930 = vmatprep.subr.bf16.mxu0 0
      %931 = vmatpush2.bf16.msra.mxu0 0
      %932 = vmatprep.subr.bf16.mxu0 0
      %933 = vmatpush2.bf16.msra.mxu0 0
      %934 = vmatprep.subr.bf16.mxu0 0
      %935 = vmatpush2.bf16.msra.mxu0 0
      %936 = vmatprep.subr.bf16.mxu0 0
      %937 = vmatpush2.bf16.msra.mxu0 0
      %938 = vmatprep.subr.bf16.mxu0 0
      %939 = vmatpush2.bf16.msra.mxu0 0
      %940 = vmatprep.subr.bf16.mxu0 0
      %941 = vmatpush2.bf16.msra.mxu0 0
      %942 = vmatprep.subr.bf16.mxu0 0
      %943 = vmatpush2.bf16.msra.mxu0 0
      %944 = vmatprep.mubr.bf16.mxu0 0
      %945 = vmatmul.mubr.bf16.gmra.mxu0 %v860
      %v946 = vpop.f32.mrf.mxu0
      %v947 = vadd.f32 0.0, %v946
      %v948 = vpop.f32.mrf.mxu0
      %v949 = vpop.f32.mrf.mxu0
      %v950 = vpop.f32.mrf.mxu0
      %951 = vdwg.mxu0
      %v952 = vadd.f32 %v823, %v906
      %v953 = vadd.f32 %v824, %v908
      %v954 = vadd.f32 %v825, %v947
      %v955 = vld [vmem:[%s192] sm:$0xff]
      %s956 = scalar_lea.vmem %s1, 24
      %v957 = vld [vmem:[%s956] sm:$0xf]
      %v959 = vcombine.high %v955, %v955
      %v961 = vunpack.c.l.s4 1983009808
      %v962 = vunpack.c.0.s8 %v961
      %v963 = vlaneseq
      %v964 = vshrl.u32 %v963, 7
      %v965 = vsub.s32 %v962, %v964
      %v966 = vrot.slane %v955, %v965
      %v968 = vunpack.c.l.s4 1983009808
      %v969 = vunpack.c.0.s8 %v968
      %v970 = vlaneseq
      %v971 = vshrl.u32 %v970, 7
      %v972 = vsub.s32 %v969, %v971
      %v973 = vrot.slane %v959, %v972
      %v974 = vcombine.high %v966, %v966
      %v975 = vcombine.high %v973, %v973
      %976 = vrot.lane.b32.xlu0 %v966, 92
      %v977 = vpop.permute.xlu0 %976
      %978 = vrot.lane.b32.xlu0 %v974, 92
      %v979 = vpop.permute.xlu0 %978
      %980 = vrot.lane.b32.xlu0 %v973, 92
      %v981 = vpop.permute.xlu0 %980
      %982 = vrot.lane.b32.xlu0 %v975, 92
      %v983 = vpop.permute.xlu0 %982
      %vm984 = vcmask 752640
      %v985 = vsel %vm984, %v977, %v979
      %v986 = vsel %vm984, %v979, %v981
      %v987 = vsel %vm984, %v981, %v983
      %v989 = vsel %vm234, %v957, 0
      %v992 = vsel %vm238, %v985, 0
      %v995 = vsel %vm238, %v986, 0
      %v998 = vsel %vm238, %v987, 0
      %1000 = vmatprep.subr.bf16.mxu0 0
      %1001 = vmatpush1.bf16.msra.mxu0 0
      %1002 = vmatprep.subr.bf16.mxu0 0
      %1003 = vmatpush1.bf16.msra.mxu0 0
      %1004 = vmatprep.subr.bf16.mxu0 0
      %1005 = vmatpush1.bf16.msra.mxu0 0
      %1006 = vmatprep.subr.bf16.mxu0 0
      %1007 = vmatpush1.bf16.msra.mxu0 0
      %1008 = vmatprep.subr.bf16.mxu0 0
      %1009 = vmatpush1.bf16.msra.mxu0 0
      %1010 = vmatprep.subr.bf16.mxu0 0
      %1011 = vmatpush1.bf16.msra.mxu0 0
      %1012 = vmatprep.subr.bf16.mxu0 0
      %1013 = vmatpush1.bf16.msra.mxu0 0
      %1014 = vmatprep.subr.bf16.mxu0 %v995
      %1015 = vmatpush1.bf16.msra.mxu0 %v992
      %1016 = vmatprep.subr.bf16.mxu0 0
      %1017 = vmatpush2.bf16.msra.mxu0 0
      %1018 = vmatprep.subr.bf16.mxu0 0
      %1019 = vmatpush2.bf16.msra.mxu0 0
      %1020 = vmatprep.subr.bf16.mxu0 0
      %1021 = vmatpush2.bf16.msra.mxu0 0
      %1022 = vmatprep.subr.bf16.mxu0 0
      %1023 = vmatpush2.bf16.msra.mxu0 0
      %1024 = vmatprep.subr.bf16.mxu0 0
      %1025 = vmatpush2.bf16.msra.mxu0 0
      %1026 = vmatprep.subr.bf16.mxu0 0
      %1027 = vmatpush2.bf16.msra.mxu0 0
      %1028 = vmatprep.subr.bf16.mxu0 0
      %1029 = vmatpush2.bf16.msra.mxu0 0
      %1030 = vmatprep.subr.bf16.mxu0 0
      %1031 = vmatpush2.bf16.msra.mxu0 0
      %1032 = vmatprep.mubr.bf16.mxu0 0
      %1033 = vmatmul.mubr.bf16.gmra.mxu0 %v989
      %v1034 = vpop.f32.mrf.mxu0
      %v1035 = vadd.f32 0.0, %v1034
      %v1036 = vpop.f32.mrf.mxu0
      %v1037 = vadd.f32 0.0, %v1036
      %v1038 = vpop.f32.mrf.mxu0
      %v1039 = vpop.f32.mrf.mxu0
      %1040 = vdwg.mxu0
      %1041 = vmatprep.subr.bf16.mxu0 0
      %1042 = vmatpush1.bf16.msra.mxu0 0
      %1043 = vmatprep.subr.bf16.mxu0 0
      %1044 = vmatpush1.bf16.msra.mxu0 0
      %1045 = vmatprep.subr.bf16.mxu0 0
      %1046 = vmatpush1.bf16.msra.mxu0 0
      %1047 = vmatprep.subr.bf16.mxu0 0
      %1048 = vmatpush1.bf16.msra.mxu0 0
      %1049 = vmatprep.subr.bf16.mxu0 0
      %1050 = vmatpush1.bf16.msra.mxu0 0
      %1051 = vmatprep.subr.bf16.mxu0 0
      %1052 = vmatpush1.bf16.msra.mxu0 0
      %1053 = vmatprep.subr.bf16.mxu0 0
      %1054 = vmatpush1.bf16.msra.mxu0 0
      %1055 = vmatprep.subr.bf16.mxu0 0
      %1056 = vmatpush1.bf16.msra.mxu0 %v998
      %1057 = vmatprep.subr.bf16.mxu0 0
      %1058 = vmatpush2.bf16.msra.mxu0 0
      %1059 = vmatprep.subr.bf16.mxu0 0
      %1060 = vmatpush2.bf16.msra.mxu0 0
      %1061 = vmatprep.subr.bf16.mxu0 0
      %1062 = vmatpush2.bf16.msra.mxu0 0
      %1063 = vmatprep.subr.bf16.mxu0 0
      %1064 = vmatpush2.bf16.msra.mxu0 0
      %1065 = vmatprep.subr.bf16.mxu0 0
      %1066 = vmatpush2.bf16.msra.mxu0 0
      %1067 = vmatprep.subr.bf16.mxu0 0
      %1068 = vmatpush2.bf16.msra.mxu0 0
      %1069 = vmatprep.subr.bf16.mxu0 0
      %1070 = vmatpush2.bf16.msra.mxu0 0
      %1071 = vmatprep.subr.bf16.mxu0 0
      %1072 = vmatpush2.bf16.msra.mxu0 0
      %1073 = vmatprep.mubr.bf16.mxu0 0
      %1074 = vmatmul.mubr.bf16.gmra.mxu0 %v989
      %v1075 = vpop.f32.mrf.mxu0
      %v1076 = vadd.f32 0.0, %v1075
      %v1077 = vpop.f32.mrf.mxu0
      %v1078 = vpop.f32.mrf.mxu0
      %v1079 = vpop.f32.mrf.mxu0
      %1080 = vdwg.mxu0
      %v1081 = vadd.f32 %v952, %v1035
      %v1082 = vadd.f32 %v953, %v1037
      %v1083 = vadd.f32 %v954, %v1076
      %v1084 = vld [vmem:[%s192] sm:$0xff]
      %s1085 = scalar_lea.vmem %s1, 28
      %v1086 = vld [vmem:[%s1085] sm:$0xf]
      %v1088 = vcombine.high %v1084, %v1084
      %v1090 = vunpack.c.l.s4 1983009808
      %v1091 = vunpack.c.0.s8 %v1090
      %v1092 = vlaneseq
      %v1093 = vshrl.u32 %v1092, 7
      %v1094 = vsub.s32 %v1091, %v1093
      %v1095 = vrot.slane %v1084, %v1094
      %v1097 = vunpack.c.l.s4 1983009808
      %v1098 = vunpack.c.0.s8 %v1097
      %v1099 = vlaneseq
      %v1100 = vshrl.u32 %v1099, 7
      %v1101 = vsub.s32 %v1098, %v1100
      %v1102 = vrot.slane %v1088, %v1101
      %v1103 = vcombine.high %v1095, %v1095
      %v1104 = vcombine.high %v1102, %v1102
      %1105 = vrot.lane.b32.xlu0 %v1095, 91
      %v1106 = vpop.permute.xlu0 %1105
      %1107 = vrot.lane.b32.xlu0 %v1103, 91
      %v1108 = vpop.permute.xlu0 %1107
      %1109 = vrot.lane.b32.xlu0 %v1102, 91
      %v1110 = vpop.permute.xlu0 %1109
      %1111 = vrot.lane.b32.xlu0 %v1104, 91
      %v1112 = vpop.permute.xlu0 %1111
      %vm1113 = vcmask 744448
      %v1114 = vsel %vm1113, %v1106, %v1108
      %v1115 = vsel %vm1113, %v1108, %v1110
      %v1116 = vsel %vm1113, %v1110, %v1112
      %v1118 = vsel %vm234, %v1086, 0
      %v1121 = vsel %vm238, %v1114, 0
      %v1124 = vsel %vm238, %v1115, 0
      %v1127 = vsel %vm238, %v1116, 0
      %1129 = vmatprep.subr.bf16.mxu0 0
      %1130 = vmatpush1.bf16.msra.mxu0 0
      %1131 = vmatprep.subr.bf16.mxu0 0
      %1132 = vmatpush1.bf16.msra.mxu0 0
      %1133 = vmatprep.subr.bf16.mxu0 0
      %1134 = vmatpush1.bf16.msra.mxu0 0
      %1135 = vmatprep.subr.bf16.mxu0 0
      %1136 = vmatpush1.bf16.msra.mxu0 0
      %1137 = vmatprep.subr.bf16.mxu0 0
      %1138 = vmatpush1.bf16.msra.mxu0 0
      %1139 = vmatprep.subr.bf16.mxu0 0
      %1140 = vmatpush1.bf16.msra.mxu0 0
      %1141 = vmatprep.subr.bf16.mxu0 0
      %1142 = vmatpush1.bf16.msra.mxu0 0
      %1143 = vmatprep.subr.bf16.mxu0 %v1124
      %1144 = vmatpush1.bf16.msra.mxu0 %v1121
      %1145 = vmatprep.subr.bf16.mxu0 0
      %1146 = vmatpush2.bf16.msra.mxu0 0
      %1147 = vmatprep.subr.bf16.mxu0 0
      %1148 = vmatpush2.bf16.msra.mxu0 0
      %1149 = vmatprep.subr.bf16.mxu0 0
      %1150 = vmatpush2.bf16.msra.mxu0 0
      %1151 = vmatprep.subr.bf16.mxu0 0
      %1152 = vmatpush2.bf16.msra.mxu0 0
      %1153 = vmatprep.subr.bf16.mxu0 0
      %1154 = vmatpush2.bf16.msra.mxu0 0
      %1155 = vmatprep.subr.bf16.mxu0 0
      %1156 = vmatpush2.bf16.msra.mxu0 0
      %1157 = vmatprep.subr.bf16.mxu0 0
      %1158 = vmatpush2.bf16.msra.mxu0 0
      %1159 = vmatprep.subr.bf16.mxu0 0
      %1160 = vmatpush2.bf16.msra.mxu0 0
      %1161 = vmatprep.mubr.bf16.mxu0 0
      %1162 = vmatmul.mubr.bf16.gmra.mxu0 %v1118
      %v1163 = vpop.f32.mrf.mxu0
      %v1164 = vadd.f32 0.0, %v1163
      %v1165 = vpop.f32.mrf.mxu0
      %v1166 = vadd.f32 0.0, %v1165
      %v1167 = vpop.f32.mrf.mxu0
      %v1168 = vpop.f32.mrf.mxu0
      %1169 = vdwg.mxu0
      %1170 = vmatprep.subr.bf16.mxu0 0
      %1171 = vmatpush1.bf16.msra.mxu0 0
      %1172 = vmatprep.subr.bf16.mxu0 0
      %1173 = vmatpush1.bf16.msra.mxu0 0
      %1174 = vmatprep.subr.bf16.mxu0 0
      %1175 = vmatpush1.bf16.msra.mxu0 0
      %1176 = vmatprep.subr.bf16.mxu0 0
      %1177 = vmatpush1.bf16.msra.mxu0 0
      %1178 = vmatprep.subr.bf16.mxu0 0
      %1179 = vmatpush1.bf16.msra.mxu0 0
      %1180 = vmatprep.subr.bf16.mxu0 0
      %1181 = vmatpush1.bf16.msra.mxu0 0
      %1182 = vmatprep.subr.bf16.mxu0 0
      %1183 = vmatpush1.bf16.msra.mxu0 0
      %1184 = vmatprep.subr.bf16.mxu0 0
      %1185 = vmatpush1.bf16.msra.mxu0 %v1127
      %1186 = vmatprep.subr.bf16.mxu0 0
      %1187 = vmatpush2.bf16.msra.mxu0 0
      %1188 = vmatprep.subr.bf16.mxu0 0
      %1189 = vmatpush2.bf16.msra.mxu0 0
      %1190 = vmatprep.subr.bf16.mxu0 0
      %1191 = vmatpush2.bf16.msra.mxu0 0
      %1192 = vmatprep.subr.bf16.mxu0 0
      %1193 = vmatpush2.bf16.msra.mxu0 0
      %1194 = vmatprep.subr.bf16.mxu0 0
      %1195 = vmatpush2.bf16.msra.mxu0 0
      %1196 = vmatprep.subr.bf16.mxu0 0
      %1197 = vmatpush2.bf16.msra.mxu0 0
      %1198 = vmatprep.subr.bf16.mxu0 0
      %1199 = vmatpush2.bf16.msra.mxu0 0
      %1200 = vmatprep.subr.bf16.mxu0 0
      %1201 = vmatpush2.bf16.msra.mxu0 0
      %1202 = vmatprep.mubr.bf16.mxu0 0
      %1203 = vmatmul.mubr.bf16.gmra.mxu0 %v1118
      %v1204 = vpop.f32.mrf.mxu0
      %v1205 = vadd.f32 0.0, %v1204
      %v1206 = vpop.f32.mrf.mxu0
      %v1207 = vpop.f32.mrf.mxu0
      %v1208 = vpop.f32.mrf.mxu0
      %1209 = vdwg.mxu0
      %v1210 = vadd.f32 %v1081, %v1164
      %v1211 = vadd.f32 %v1082, %v1166
      %v1212 = vadd.f32 %v1083, %v1205
      %v1213 = vld [vmem:[%s192] sm:$0xff]
      %s1214 = scalar_lea.vmem %s1, 32
      %v1215 = vld [vmem:[%s1214] sm:$0xf]
      %v1217 = vcombine.high %v1213, %v1213
      %v1219 = vunpack.c.l.s4 1983009808
      %v1220 = vunpack.c.0.s8 %v1219
      %v1221 = vlaneseq
      %v1222 = vshrl.u32 %v1221, 7
      %v1223 = vsub.s32 %v1220, %v1222
      %v1224 = vrot.slane %v1213, %v1223
      %v1226 = vunpack.c.l.s4 1983009808
      %v1227 = vunpack.c.0.s8 %v1226
      %v1228 = vlaneseq
      %v1229 = vshrl.u32 %v1228, 7
      %v1230 = vsub.s32 %v1227, %v1229
      %v1231 = vrot.slane %v1217, %v1230
      %v1232 = vcombine.high %v1224, %v1224
      %v1233 = vcombine.high %v1231, %v1231
      %1234 = vrot.lane.b32.xlu0 %v1224, 90
      %v1235 = vpop.permute.xlu0 %1234
      %1236 = vrot.lane.b32.xlu0 %v1232, 90
      %v1237 = vpop.permute.xlu0 %1236
      %1238 = vrot.lane.b32.xlu0 %v1231, 90
      %v1239 = vpop.permute.xlu0 %1238
      %1240 = vrot.lane.b32.xlu0 %v1233, 90
      %v1241 = vpop.permute.xlu0 %1240
      %vm1242 = vcmask 736256
      %v1243 = vsel %vm1242, %v1235, %v1237
      %v1244 = vsel %vm1242, %v1237, %v1239
      %v1245 = vsel %vm1242, %v1239, %v1241
      %v1247 = vsel %vm234, %v1215, 0
      %v1250 = vsel %vm238, %v1243, 0
      %v1253 = vsel %vm238, %v1244, 0
      %v1256 = vsel %vm238, %v1245, 0
      %1258 = vmatprep.subr.bf16.mxu0 0
      %1259 = vmatpush1.bf16.msra.mxu0 0
      %1260 = vmatprep.subr.bf16.mxu0 0
      %1261 = vmatpush1.bf16.msra.mxu0 0
      %1262 = vmatprep.subr.bf16.mxu0 0
      %1263 = vmatpush1.bf16.msra.mxu0 0
      %1264 = vmatprep.subr.bf16.mxu0 0
      %1265 = vmatpush1.bf16.msra.mxu0 0
      %1266 = vmatprep.subr.bf16.mxu0 0
      %1267 = vmatpush1.bf16.msra.mxu0 0
      %1268 = vmatprep.subr.bf16.mxu0 0
      %1269 = vmatpush1.bf16.msra.mxu0 0
      %1270 = vmatprep.subr.bf16.mxu0 0
      %1271 = vmatpush1.bf16.msra.mxu0 0
      %1272 = vmatprep.subr.bf16.mxu0 %v1253
      %1273 = vmatpush1.bf16.msra.mxu0 %v1250
      %1274 = vmatprep.subr.bf16.mxu0 0
      %1275 = vmatpush2.bf16.msra.mxu0 0
      %1276 = vmatprep.subr.bf16.mxu0 0
      %1277 = vmatpush2.bf16.msra.mxu0 0
      %1278 = vmatprep.subr.bf16.mxu0 0
      %1279 = vmatpush2.bf16.msra.mxu0 0
      %1280 = vmatprep.subr.bf16.mxu0 0
      %1281 = vmatpush2.bf16.msra.mxu0 0
      %1282 = vmatprep.subr.bf16.mxu0 0
      %1283 = vmatpush2.bf16.msra.mxu0 0
      %1284 = vmatprep.subr.bf16.mxu0 0
      %1285 = vmatpush2.bf16.msra.mxu0 0
      %1286 = vmatprep.subr.bf16.mxu0 0
      %1287 = vmatpush2.bf16.msra.mxu0 0
      %1288 = vmatprep.subr.bf16.mxu0 0
      %1289 = vmatpush2.bf16.msra.mxu0 0
      %1290 = vmatprep.mubr.bf16.mxu0 0
      %1291 = vmatmul.mubr.bf16.gmra.mxu0 %v1247
      %v1292 = vpop.f32.mrf.mxu0
      %v1293 = vadd.f32 0.0, %v1292
      %v1294 = vpop.f32.mrf.mxu0
      %v1295 = vadd.f32 0.0, %v1294
      %v1296 = vpop.f32.mrf.mxu0
      %v1297 = vpop.f32.mrf.mxu0
      %1298 = vdwg.mxu0
      %1299 = vmatprep.subr.bf16.mxu0 0
      %1300 = vmatpush1.bf16.msra.mxu0 0
      %1301 = vmatprep.subr.bf16.mxu0 0
      %1302 = vmatpush1.bf16.msra.mxu0 0
      %1303 = vmatprep.subr.bf16.mxu0 0
      %1304 = vmatpush1.bf16.msra.mxu0 0
      %1305 = vmatprep.subr.bf16.mxu0 0
      %1306 = vmatpush1.bf16.msra.mxu0 0
      %1307 = vmatprep.subr.bf16.mxu0 0
      %1308 = vmatpush1.bf16.msra.mxu0 0
      %1309 = vmatprep.subr.bf16.mxu0 0
      %1310 = vmatpush1.bf16.msra.mxu0 0
      %1311 = vmatprep.subr.bf16.mxu0 0
      %1312 = vmatpush1.bf16.msra.mxu0 0
      %1313 = vmatprep.subr.bf16.mxu0 0
      %1314 = vmatpush1.bf16.msra.mxu0 %v1256
      %1315 = vmatprep.subr.bf16.mxu0 0
      %1316 = vmatpush2.bf16.msra.mxu0 0
      %1317 = vmatprep.subr.bf16.mxu0 0
      %1318 = vmatpush2.bf16.msra.mxu0 0
      %1319 = vmatprep.subr.bf16.mxu0 0
      %1320 = vmatpush2.bf16.msra.mxu0 0
      %1321 = vmatprep.subr.bf16.mxu0 0
      %1322 = vmatpush2.bf16.msra.mxu0 0
      %1323 = vmatprep.subr.bf16.mxu0 0
      %1324 = vmatpush2.bf16.msra.mxu0 0
      %1325 = vmatprep.subr.bf16.mxu0 0
      %1326 = vmatpush2.bf16.msra.mxu0 0
      %1327 = vmatprep.subr.bf16.mxu0 0
      %1328 = vmatpush2.bf16.msra.mxu0 0
      %1329 = vmatprep.subr.bf16.mxu0 0
      %1330 = vmatpush2.bf16.msra.mxu0 0
      %1331 = vmatprep.mubr.bf16.mxu0 0
      %1332 = vmatmul.mubr.bf16.gmra.mxu0 %v1247
      %v1333 = vpop.f32.mrf.mxu0
      %v1334 = vadd.f32 0.0, %v1333
      %v1335 = vpop.f32.mrf.mxu0
      %v1336 = vpop.f32.mrf.mxu0
      %v1337 = vpop.f32.mrf.mxu0
      %1338 = vdwg.mxu0
      %v1339 = vadd.f32 %v1210, %v1293
      %v1340 = vadd.f32 %v1211, %v1295
      %v1341 = vadd.f32 %v1212, %v1334
      %v1342 = vld [vmem:[%s2] sm:$0xff]
      %1344 = vset.pattern.permute.xlu0 0
      %1345 = vperm.xlu0 %1344, %v1342
      %v1346 = vpop.permute.xlu0 %1345
      %v1348 = vmul.f32 %v1339, %v1346
      %v1349 = vmul.f32 %v1340, %v1346
      %v1350 = vmul.f32 %v1341, %v1346
      %v1351 = vld [vmem:[%s3] sm:$0xff]
      %1353 = vset.pattern.permute.xlu0 0
      %1354 = vperm.xlu0 %1353, %v1351
      %v1355 = vpop.permute.xlu0 %1354
      %v1357 = vadd.f32 %v1348, %v1355
      %v1358 = vadd.f32 %v1349, %v1355
      %v1359 = vadd.f32 %v1350, %v1355
      %v1360 = vmax.f32 %v1357, 0.0
      %v1361 = vmax.f32 %v1358, 0.0
      %v1362 = vmax.f32 %v1359, 0.0
      %1363 = vst [vmem:[%s197] sm:$0xff] %v1360
      %1364 = vst [vmem:[%s197 + $0x8] sm:$0xff] %v1361
      %1365 = vst [vmem:[%s197 + $0x10] sm:$0xff] %v1362
      %p1366 = scmp.lt.s32.totalorder %s15, 1
      %s1367 = scalar_select %p1366, %s15, 1
      %s1368 = smul.addr %s1367, 3
      %s1369 = smul.addr %s1368, 8
      %s1370 = scalar_lea.vmem %s4, %s1369
      // Predicated region
      $region37: #{conv_block.3} parent=35 // pred_check
        %p1371 = pneg %p122
      $region38: #{conv_block.3} parent=35 // pred_check_branch
        %1373 = sbr.rel (%p1371) target = $region40
      $region39: #{conv_block.3} parent=35 // pred_region
        _
      $region40: #{conv_block.3} parent=35 // pred_fallthru
        _
    $region36: #{conv_block.3} parent=5 // pred_fallthru
      _
    %p1374 = scmp.le.s32.totalorder 2, %s10
    // Predicated region
    $region41: #{conv_block.3} parent=5 // pred_check
      %p1375 = pneg %p1374
    $region42: #{conv_block.3} parent=5 // pred_check_branch
      %1377 = sbr.rel (%p1375) target = $region44
    $region43: #{conv_block.3} parent=5 // pred_region
      %s1378 = ssub.s32 %s10, 2
      // Predicated region
      $region45: #{conv_block.3} parent=43 // pred_check
        %p1379 = pneg %p128
      $region46: #{conv_block.3} parent=43 // pred_check_branch
        %1381 = sbr.rel (%p1379) target = $region48
      $region47: #{conv_block.3} parent=43 // pred_region
        %p1382 = scmp.lt.s32.totalorder %s16, 1
        %s1383 = scalar_select %p1382, %s16, 1
        %s1384 = smul.addr %s1383, 3
        %s1385 = smul.addr %s1384, 8
        %s1386 = scalar_lea.vmem %s4, %s1385
      $region48: #{conv_block.3} parent=43 // pred_fallthru
        _
    $region44: #{conv_block.3} parent=5 // pred_fallthru
      _
  $region6: #{conv_block.3} parent=0 // loop_footer
    %s14 = sadd.s32 1, %s10
  $region7: #{conv_block.3} parent=0 // loop_footer_branch
    %9 = sbr.rel target = $region3
  $region8: #{conv_block.3} parent=0 // loop_exit
    _

</llo_original>
